<compile_context>
chip_gen: v7x
topology: tpu7x:2x2x1
jax: 0.10.0
libtpu: 0.0.40
codegen_flags: <defaults>
</compile_context>

<pallas_src>
import functools

import jax
import jax.numpy as jnp
from jax.experimental import pallas as pl
from jax.experimental.pallas import tpu as pltpu

# --- synthetic cfg constants ---------------------------------------------------
SIGMA = 1.0        # cfg.SIGMA
E_THETA = 0.1      # cfg.E_THETA
E_ALPHA = 1.0      # cfg.E_ALPHA
THETA = 0.5        # cfg.THETA   (RelationLoss weight in TotalLoss_15)
NCE_TEMP = 0.07
ACTE_LEN = 750     # hardcoded `for i in range(750)` in ActELoss_v2
ACTE_WIN = 11      # hardcoded `for j in range(11)`
ACTE_PAD_LEFT = 6  # torch left-pad width; window j==6 equals the unshifted row
ATTN_SPLIT = 150   # SniCoLoss_v5 hardcodes attention[:, :150, 0] / [:, 150:300, 0]

_LANE = 128
_L_PAD = 768       # 750 -> 6*128 lane-dense; zero-padded tail contributes 0 by construction

_VMEM = pltpu.MemorySpace.VMEM


# ============================== fused total-loss kernel =========================
def _total_loss_kernel(ctr_ref, misc_ref, acte_ref, o_ref, *,
                       sigma, e_theta, e_alpha, theta, temp, layout):
    f32 = jnp.float32
    misc = misc_ref[...].astype(f32)

    def take(name):                                 # static sub-slab extraction
        off, nr, nc = layout[name]
        return misc[off:off + nr, 0:nc]

    # ------------------------------ ActionLoss (BCE) ----------------------------
    p = take("scores")                              # [B, C] probabilities
    y = take("label")                               # [B, C]
    y = y / jnp.sum(y, axis=1, keepdims=True)       # NaN for all-zero rows == torch
    log_p = jnp.maximum(jnp.log(p), -100.0)         # torch BCELoss clamps log at -100
    log_1mp = jnp.maximum(jnp.log(1.0 - p), -100.0)
    bce = -(y * log_p + (1.0 - y) * log_1mp)
    loss_cls = jnp.mean(bce, axis=(0, 1), keepdims=True)                      # (1,1)

    # ------------------------ SniCoLoss_v5 (both NCE directions) ----------------
    att_a = take("att_a")                           # [N, T]
    att_b = take("att_b")
    n_ctr = att_a.shape[0]
    inv_temp = 1.0 / temp
    eps2 = 1e-24                                    # (F.normalize eps=1e-12)^2

    def nce(a_base, b_base, neg_base, att):
        acc = jnp.zeros((1, 1), f32)
        for i in range(n_ctr):                      # N is tiny & static -> unrolled, all-2D ops
            a = ctr_ref[a_base + i].astype(f32)     # [C, T] (C on sublanes, T on lanes)
            b = ctr_ref[b_base + i].astype(f32)
            neg = ctr_ref[neg_base + i].astype(f32)
            atti = att[i:i + 1, :]                  # [1, T]
            inv_t = 1.0 / a.shape[1]
            q = jnp.sum(a, axis=1, keepdims=True) * inv_t                     # [C, 1]
            k = jnp.sum(b, axis=1, keepdims=True) * inv_t
            q = q * jax.lax.rsqrt(jnp.maximum(jnp.sum(q * q, axis=0, keepdims=True), eps2))
            k = k * jax.lax.rsqrt(jnp.maximum(jnp.sum(k * k, axis=0, keepdims=True), eps2))
            l_pos = jnp.sum(q * k, axis=0, keepdims=True)                     # (1,1)
            # attention-weighted negatives; normalize the dot, not the full tensor
            dots = jnp.sum(q * neg, axis=0, keepdims=True)                    # (1,T)
            inv_nrm = jax.lax.rsqrt(
                jnp.maximum(jnp.sum(neg * neg, axis=0, keepdims=True), eps2)) # (1,T)
            l_neg = atti * dots * inv_nrm
            lp = l_pos * inv_temp
            ln = l_neg * inv_temp
            # CE against class 0 == logsumexp(logits) - logits[0]
            m = jnp.maximum(lp, jnp.max(ln, axis=1, keepdims=True))
            lse = m + jnp.log(jnp.exp(lp - m)
                              + jnp.sum(jnp.exp(ln - m), axis=1, keepdims=True))
            acc = acc + (lse - lp)
        return acc * (1.0 / n_ctr)

    # ctr_ref rows: [HA_0..HA_{N-1}, EA_*, HB_*, EB_*]
    loss_snico = (nce(0 * n_ctr, 1 * n_ctr, 3 * n_ctr, att_a)
                  + nce(2 * n_ctr, 3 * n_ctr, 1 * n_ctr, att_b))              # (1,1)

    # -------------------------------- RelationLoss ------------------------------
    s = take("s")                                   # stacked s scores
    d = take("d")                                   # stacked d scores
    loss_rel = (jnp.mean((1.0 - s) * (1.0 - s), axis=(0, 1), keepdims=True)
                + jnp.mean(d * d, axis=(0, 1), keepdims=True))                # (1,1)

    # --------------------------------- ActELoss_v2 -------------------------------
    bsz = acte_ref.shape[0] // 2
    acte_win = acte_ref.shape[1]
    l_pad = acte_ref.shape[2]
    inv_2s2 = 1.0 / (2.0 * sigma * sigma)
    inv_b = 1.0 / bsz

    sumsq = jnp.zeros((acte_win, l_pad), f32)       # sum_b (a0 - a4[:, j:j+L])^2
    tsum = jnp.zeros((acte_win, l_pad), f32)        # sum_b |a2 - a3[:, j:j+L]|
    ddsq = jnp.zeros((1, l_pad), f32)               # sum_b (a0 - a2)^2
    for b in range(bsz):                            # B is tiny & static -> unrolled vreg adds
        s4b = acte_ref[b].astype(f32)               # [11, 768] a4 windows for batch b
        s3b = acte_ref[bsz + b].astype(f32)         # [11, 768] a3 windows for batch b
        a0b = s4b[ACTE_PAD_LEFT:ACTE_PAD_LEFT + 1, :]   # [1, 768] == actioness row b
        a2b = s3b[ACTE_PAD_LEFT:ACTE_PAD_LEFT + 1, :]   # [1, 768] == actioness_2 row b
        d0 = a0b - s4b
        sumsq = sumsq + d0 * d0
        tsum = tsum + jnp.abs(a2b - s3b)
        dd = a0b - a2b
        ddsq = ddsq + dd * dd
    w = jnp.exp(-sumsq * inv_2s2)                   # ONE exp over the stacked [11,768] windows
    # zero-padded lanes: sumsq==0 -> w==1, but tsum==0 there -> contribution is 0
    pair_loss = jnp.sum(w * tsum, axis=(0, 1), keepdims=True) * inv_b         # (1,1)
    reg = e_theta * inv_b * jnp.sum(ddsq, axis=(0, 1), keepdims=True)         # (1,1)
    loss_act = (pair_loss + reg) * e_alpha

    # --------------------------- weighted total + packing ------------------------
    loss_total = loss_cls + 0.01 * loss_snico + loss_act + theta * loss_rel

    lane = jax.lax.broadcasted_iota(jnp.int32, (1, o_ref.shape[1]), 1)
    row = (jnp.where(lane == 0, loss_cls, 0.0)
           + jnp.where(lane == 1, loss_snico, 0.0)
           + jnp.where(lane == 2, loss_act, 0.0)
           + jnp.where(lane == 3, loss_rel, 0.0)
           + jnp.where(lane == 4, loss_total, 0.0))
    o_ref[...] = row                                # single unmasked lane-dense store


# ================================ wrapper (layout glue) ==========================
def _pad_like_torch(x):
    """Replicates torch `repeat(1, 6).reshape(B, 6)` replication padding exactly
    (including the batch-interleaving it produces for B > 1 and the fact that the
    final `[:, 6:-5] = x` write overwrites column L+5 with x[:, -1])."""
    b = x.shape[0]
    left = jnp.tile(x[:, 0], 6).reshape(b, 6)
    right = jnp.tile(x[:, -1], 6).reshape(b, 6)
    return jnp.concatenate([left, x, right[:, 1:]], axis=1)       # [B, L + 11]


def total_loss_15(video_scores, label, contrast_pairs, re_s_scores, re_d_scores,
                  actioness, actioness_2, attention_scores,
                  *, sigma=SIGMA, e_theta=E_THETA, e_alpha=E_ALPHA, theta=THETA,
                  temp=NCE_TEMP):
    f32 = jnp.float32
    bsz, length = actioness.shape
    assert length == ACTE_LEN, "ActELoss_v2 loop is hardcoded to length 750"
    n_ctr, t_ctr, _ = contrast_pairs["HA"].shape
    assert t_ctr == ATTN_SPLIT

    # --- contrast slab: per (tensor, n) a [C, T] tile (C sublanes, T lanes) ------
    ctr = jnp.concatenate(
        [jnp.transpose(contrast_pairs[k].astype(f32), (0, 2, 1))
         for k in ("HA", "EA", "HB", "EB")], axis=0)               # [4N, C, T]

    # --- small misc slab (scores / label / attention / relation scores) ---------
    att_a = attention_scores[:, :ATTN_SPLIT, 0].astype(f32)
    att_b = attention_scores[:, ATTN_SPLIT:2 * ATTN_SPLIT, 0].astype(f32)
    # TODO(synk): if relation-score list entries had different shapes, per-tensor
    # means would be needed instead of one mean over the concatenated slab.
    s_all = jnp.concatenate([jnp.asarray(s, f32) for s in re_s_scores], axis=0)
    d_all = jnp.concatenate([jnp.asarray(d, f32) for d in re_d_scores], axis=0)

    pieces = (("scores", video_scores.astype(f32)),
              ("label", label.astype(f32)),
              ("att_a", att_a), ("att_b", att_b),
              ("s", s_all), ("d", d_all))
    lane_w = -(-max(p.shape[1] for _, p in pieces) // _LANE) * _LANE
    layout, rows, off = {}, [], 0
    for name, p in pieces:
        layout[name] = (off, p.shape[0], p.shape[1])
        rows.append(jnp.pad(p, ((0, 0), (0, lane_w - p.shape[1]))))
        off += p.shape[0]
    misc = jnp.concatenate(rows, axis=0)                           # [R, lane_w]

    # --- ActE slab: 11 shifted windows of the torch-padded rows, zero lane-pad ---
    a0 = jax.lax.stop_gradient(actioness).astype(f32)   # module passes actioness.detach()
    a2 = actioness_2.astype(f32)
    a4 = _pad_like_torch(a0)                             # [B, 761]
    a3 = _pad_like_torch(a2)
    sh4 = jnp.stack([a4[:, j:j + length] for j in range(ACTE_WIN)], axis=1)   # [B,11,750]
    sh3 = jnp.stack([a3[:, j:j + length] for j in range(ACTE_WIN)], axis=1)
    acte = jnp.concatenate([sh4, sh3], axis=0)           # [2B, 11, 750]
    acte = jnp.pad(acte, ((0, 0), (0, 0), (0, _L_PAD - length)))   # [2B, 11, 768]

    kernel = functools.partial(
        _total_loss_kernel,
        sigma=float(sigma), e_theta=float(e_theta), e_alpha=float(e_alpha),
        theta=float(theta), temp=float(temp), layout=layout)

    out = pl.pallas_call(
        kernel,
        out_shape=jax.ShapeDtypeStruct((1, _LANE), jnp.float32),
        in_specs=[pl.BlockSpec(memory_space=_VMEM)] * 3,
        out_specs=pl.BlockSpec(memory_space=_VMEM),
    )(ctr, misc, acte)

    loss_cls, loss_snico, loss_act, loss_rel, loss_total = (
        out[0, 0], out[0, 1], out[0, 2], out[0, 3], out[0, 4])
    loss_dict = {
        "Loss/Action": loss_cls,
        "Loss/SniCo": loss_snico,
        "Loss/ActE": loss_act,
        "Loss/Relation": loss_rel,
        "Loss/Total": loss_total,
    }
    return loss_total, loss_dict


# ================================ pure-JAX reference ==============================
def _ref_total(video_scores, label, contrast_pairs, re_s_scores, re_d_scores,
               actioness, actioness_2, attention_scores):
    # ActionLoss
    y = label / jnp.sum(label, axis=1, keepdims=True)
    p = video_scores
    bce = -(y * jnp.maximum(jnp.log(p), -100.0)
            + (1.0 - y) * jnp.maximum(jnp.log(1.0 - p), -100.0))
    loss_cls = jnp.mean(bce)

    # SniCoLoss_v5
    def nce(a, b, neg, att):
        eps = 1e-12
        q = jnp.mean(a, axis=1)
        k = jnp.mean(b, axis=1)
        q = q / jnp.maximum(jnp.linalg.norm(q, axis=1, keepdims=True), eps)
        k = k / jnp.maximum(jnp.linalg.norm(k, axis=1, keepdims=True), eps)
        negn = neg / jnp.maximum(jnp.linalg.norm(neg, axis=2, keepdims=True), eps)
        l_pos = jnp.sum(q * k, axis=1, keepdims=True)
        l_neg = att * jnp.einsum("nc,ntc->nt", q, negn)
        logits = jnp.concatenate([l_pos, l_neg], axis=1) / NCE_TEMP
        return jnp.mean(-jax.nn.log_softmax(logits, axis=1)[:, 0])

    att_a = attention_scores[:, :ATTN_SPLIT, 0]
    att_b = attention_scores[:, ATTN_SPLIT:2 * ATTN_SPLIT, 0]
    loss_snico = (nce(contrast_pairs["HA"], contrast_pairs["EA"], contrast_pairs["EB"], att_a)
                  + nce(contrast_pairs["HB"], contrast_pairs["EB"], contrast_pairs["EA"], att_b))

    # RelationLoss
    loss_rel = sum(jnp.mean((1.0 - s) ** 2) for s in re_s_scores) / len(re_s_scores)
    loss_rel = loss_rel + sum(jnp.mean(d ** 2) for d in re_d_scores) / len(re_d_scores)

    # ActELoss_v2
    a0, a2 = actioness, actioness_2
    a4, a3 = _pad_like_torch(a0), _pad_like_torch(a2)
    loss_act = 0.0
    for j in range(ACTE_WIN):
        d0 = a0 - a4[:, j:j + ACTE_LEN]
        w = jnp.exp(-jnp.sum(d0 * d0, axis=0) / (2.0 * SIGMA * SIGMA))
        t = jnp.mean(jnp.abs(a2 - a3[:, j:j + ACTE_LEN]), axis=0)
        loss_act = loss_act + jnp.sum(w * t)
    loss_act = loss_act + E_THETA * jnp.mean(jnp.sum((a0 - a2) ** 2, axis=1))
    loss_act = loss_act * E_ALPHA

    return loss_cls + 0.01 * loss_snico + loss_act + THETA * loss_rel


# ===================================== main =======================================
if __name__ == "__main__":
    key = jax.random.PRNGKey(0)
    ks = jax.random.split(key, 12)

    B, C = 2, 4                   # video-level scores / multi-hot labels
    N, T, Cf = 2, ATTN_SPLIT, 32  # contrast pairs [batch, 150 snippets, 32 features]
    NS, ND, TR = 2, 3, 128        # relation score list lengths / per-tensor width

    video_scores = jax.nn.sigmoid(jax.random.normal(ks[0], (B, C), jnp.float32))
    label = (jax.random.uniform(ks[1], (B, C)) > 0.5).astype(jnp.float32)
    label = label.at[:, 0].set(1.0)   # guarantee non-zero row sums

    contrast_pairs = {
        "HA": jax.random.normal(ks[2], (N, T, Cf), jnp.float32),
        "EA": jax.random.normal(ks[3], (N, T, Cf), jnp.float32),
        "HB": jax.random.normal(ks[4], (N, T, Cf), jnp.float32),
        "EB": jax.random.normal(ks[5], (N, T, Cf), jnp.float32),
    }
    attention_scores = jax.nn.sigmoid(
        jax.random.normal(ks[6], (N, 2 * ATTN_SPLIT, 1), jnp.float32))

    re_s_scores = [jax.nn.sigmoid(jax.random.normal(jax.random.fold_in(ks[7], i),
                                                    (B, TR), jnp.float32))
                   for i in range(NS)]
    re_d_scores = [jax.nn.sigmoid(jax.random.normal(jax.random.fold_in(ks[8], i),
                                                    (B, TR), jnp.float32))
                   for i in range(ND)]

    actioness = jax.nn.sigmoid(jax.random.normal(ks[9], (B, ACTE_LEN), jnp.float32))
    actioness_2 = jax.nn.sigmoid(jax.random.normal(ks[10], (B, ACTE_LEN), jnp.float32))

    run = jax.jit(total_loss_15)   # fuses the wrapper's packing ops with the kernel call
    loss_total, loss_dict = run(
        video_scores, label, contrast_pairs, re_s_scores, re_d_scores,
        actioness, actioness_2, attention_scores)
    jax.block_until_ready(loss_total)

    ref = _ref_total(video_scores, label, contrast_pairs, re_s_scores, re_d_scores,
                     actioness, actioness_2, attention_scores)
    ref = float(jax.block_until_ready(ref))
    got = float(loss_total)
    assert abs(got - ref) <= 2e-3 * max(1.0, abs(ref)), (got, ref)

    print("KERNEL_OK")
</pallas_src>

<mosaic_0001>
module attributes {stable_mosaic.version = 11 : i64} {
  func.func @_total_loss_kernel(%arg0: memref<8x32x150xf32, #tpu.memory_space<vmem>>, %arg1: memref<18x256xf32, #tpu.memory_space<vmem>>, %arg2: memref<4x11x768xf32, #tpu.memory_space<vmem>>, %arg3: memref<1x128xf32, #tpu.memory_space<vmem>>) attributes {dimension_semantics = [], scalar_prefetch = 0 : i64, scratch_operands = 0 : i64, tpu.core_type = #tpu.core_type<tc>} {
    %c0 = arith.constant 0 : index
    %c0_0 = arith.constant 0 : index
    %0 = vector.load %arg1[%c0, %c0_0] : memref<18x256xf32, #tpu.memory_space<vmem>>, vector<18x256xf32>
    %1 = vector.extract_strided_slice %0 {offsets = [0, 0], sizes = [2, 4], strides = [1, 1]} : vector<18x256xf32> to vector<2x4xf32>
    %2 = vector.extract_strided_slice %0 {offsets = [2, 0], sizes = [2, 4], strides = [1, 1]} : vector<18x256xf32> to vector<2x4xf32>
    %cst = arith.constant dense<0.000000e+00> : vector<2xf32>
    %3 = vector.multi_reduction <add>, %2, %cst [1] : vector<2x4xf32> to vector<2xf32>
    %4 = vector.shape_cast %3 : vector<2xf32> to vector<2x1xf32>
    %5 = vector.broadcast %4 : vector<2x1xf32> to vector<2x4xf32>
    %6 = arith.divf %2, %5 : vector<2x4xf32>
    %7 = math.log %1 : vector<2x4xf32>
    %cst_1 = arith.constant -1.000000e+02 : f32
    %8 = vector.broadcast %cst_1 : f32 to vector<2x4xf32>
    %9 = arith.maximumf %7, %8 : vector<2x4xf32>
    %cst_2 = arith.constant 1.000000e+00 : f32
    %10 = vector.broadcast %cst_2 : f32 to vector<2x4xf32>
    %11 = arith.subf %10, %1 : vector<2x4xf32>
    %12 = math.log %11 : vector<2x4xf32>
    %cst_3 = arith.constant -1.000000e+02 : f32
    %13 = vector.broadcast %cst_3 : f32 to vector<2x4xf32>
    %14 = arith.maximumf %12, %13 : vector<2x4xf32>
    %15 = arith.mulf %6, %9 : vector<2x4xf32>
    %cst_4 = arith.constant 1.000000e+00 : f32
    %16 = vector.broadcast %cst_4 : f32 to vector<2x4xf32>
    %17 = arith.subf %16, %6 : vector<2x4xf32>
    %18 = arith.mulf %17, %14 : vector<2x4xf32>
    %19 = arith.addf %15, %18 : vector<2x4xf32>
    %cst_5 = arith.constant 0.000000e+00 : f32
    %20 = vector.broadcast %cst_5 : f32 to vector<2x4xf32>
    %21 = arith.subf %20, %19 : vector<2x4xf32>
    %22 = vector.shape_cast %21 : vector<2x4xf32> to vector<1x2x4xf32>
    %cst_6 = arith.constant dense<0.000000e+00> : vector<1xf32>
    %23 = vector.multi_reduction <add>, %22, %cst_6 [1, 2] : vector<1x2x4xf32> to vector<1xf32>
    %24 = vector.shape_cast %23 : vector<1xf32> to vector<1x1x1xf32>
    %25 = vector.extract %24[0, 0, 0] : f32 from vector<1x1x1xf32>
    %26 = vector.broadcast %25 : f32 to vector<1x1xf32>
    %cst_7 = arith.constant 8.000000e+00 : f32
    %27 = vector.broadcast %cst_7 : f32 to vector<1x1xf32>
    %28 = arith.divf %26, %27 : vector<1x1xf32>
    %29 = vector.extract_strided_slice %0 {offsets = [4, 0], sizes = [2, 150], strides = [1, 1]} : vector<18x256xf32> to vector<2x150xf32>
    %30 = vector.extract_strided_slice %0 {offsets = [6, 0], sizes = [2, 150], strides = [1, 1]} : vector<18x256xf32> to vector<2x150xf32>
    %cst_8 = arith.constant 0.000000e+00 : f32
    %31 = vector.broadcast %cst_8 : f32 to vector<1x1xf32>
    %c0_9 = arith.constant 0 : index
    %c0_10 = arith.constant 0 : index
    %c0_11 = arith.constant 0 : index
    %32 = vector.load %arg0[%c0_9, %c0_10, %c0_11] : memref<8x32x150xf32, #tpu.memory_space<vmem>>, vector<1x32x150xf32>
    %33 = vector.shape_cast %32 : vector<1x32x150xf32> to vector<32x150xf32>
    %c2 = arith.constant 2 : index
    %c0_12 = arith.constant 0 : index
    %c0_13 = arith.constant 0 : index
    %34 = vector.load %arg0[%c2, %c0_12, %c0_13] : memref<8x32x150xf32, #tpu.memory_space<vmem>>, vector<1x32x150xf32>
    %35 = vector.shape_cast %34 : vector<1x32x150xf32> to vector<32x150xf32>
    %c6 = arith.constant 6 : index
    %c0_14 = arith.constant 0 : index
    %c0_15 = arith.constant 0 : index
    %36 = vector.load %arg0[%c6, %c0_14, %c0_15] : memref<8x32x150xf32, #tpu.memory_space<vmem>>, vector<1x32x150xf32>
    %37 = vector.shape_cast %36 : vector<1x32x150xf32> to vector<32x150xf32>
    %38 = vector.extract_strided_slice %29 {offsets = [0, 0], sizes = [1, 150], strides = [1, 1]} : vector<2x150xf32> to vector<1x150xf32>
    %cst_16 = arith.constant dense<0.000000e+00> : vector<32xf32>
    %39 = vector.multi_reduction <add>, %33, %cst_16 [1] : vector<32x150xf32> to vector<32xf32>
    %40 = vector.shape_cast %39 : vector<32xf32> to vector<32x1xf32>
    %cst_17 = arith.constant 0.00666666683 : f32
    %41 = vector.broadcast %cst_17 : f32 to vector<32x1xf32>
    %42 = arith.mulf %40, %41 : vector<32x1xf32>
    %cst_18 = arith.constant dense<0.000000e+00> : vector<32xf32>
    %43 = vector.multi_reduction <add>, %35, %cst_18 [1] : vector<32x150xf32> to vector<32xf32>
    %44 = vector.shape_cast %43 : vector<32xf32> to vector<32x1xf32>
    %cst_19 = arith.constant 0.00666666683 : f32
    %45 = vector.broadcast %cst_19 : f32 to vector<32x1xf32>
    %46 = arith.mulf %44, %45 : vector<32x1xf32>
    %47 = arith.mulf %42, %42 : vector<32x1xf32>
    %cst_20 = arith.constant dense<0.000000e+00> : vector<1xf32>
    %48 = vector.multi_reduction <add>, %47, %cst_20 [0] : vector<32x1xf32> to vector<1xf32>
    %49 = vector.shape_cast %48 : vector<1xf32> to vector<1x1xf32>
    %cst_21 = arith.constant 1.000000e-24 : f32
    %50 = vector.broadcast %cst_21 : f32 to vector<1x1xf32>
    %51 = arith.maximumf %49, %50 : vector<1x1xf32>
    %52 = math.rsqrt %51 : vector<1x1xf32>
    %53 = vector.broadcast %52 : vector<1x1xf32> to vector<32x1xf32>
    %54 = arith.mulf %42, %53 : vector<32x1xf32>
    %55 = arith.mulf %46, %46 : vector<32x1xf32>
    %cst_22 = arith.constant dense<0.000000e+00> : vector<1xf32>
    %56 = vector.multi_reduction <add>, %55, %cst_22 [0] : vector<32x1xf32> to vector<1xf32>
    %57 = vector.shape_cast %56 : vector<1xf32> to vector<1x1xf32>
    %cst_23 = arith.constant 1.000000e-24 : f32
    %58 = vector.broadcast %cst_23 : f32 to vector<1x1xf32>
    %59 = arith.maximumf %57, %58 : vector<1x1xf32>
    %60 = math.rsqrt %59 : vector<1x1xf32>
    %61 = vector.broadcast %60 : vector<1x1xf32> to vector<32x1xf32>
    %62 = arith.mulf %46, %61 : vector<32x1xf32>
    %63 = arith.mulf %54, %62 : vector<32x1xf32>
    %cst_24 = arith.constant dense<0.000000e+00> : vector<1xf32>
    %64 = vector.multi_reduction <add>, %63, %cst_24 [0] : vector<32x1xf32> to vector<1xf32>
    %65 = vector.shape_cast %64 : vector<1xf32> to vector<1x1xf32>
    %66 = vector.broadcast %54 : vector<32x1xf32> to vector<32x150xf32>
    %67 = arith.mulf %66, %37 : vector<32x150xf32>
    %cst_25 = arith.constant dense<0.000000e+00> : vector<150xf32>
    %68 = vector.multi_reduction <add>, %67, %cst_25 [0] : vector<32x150xf32> to vector<150xf32>
    %69 = vector.shape_cast %68 : vector<150xf32> to vector<1x150xf32>
    %70 = arith.mulf %37, %37 : vector<32x150xf32>
    %cst_26 = arith.constant dense<0.000000e+00> : vector<150xf32>
    %71 = vector.multi_reduction <add>, %70, %cst_26 [0] : vector<32x150xf32> to vector<150xf32>
    %72 = vector.shape_cast %71 : vector<150xf32> to vector<1x150xf32>
    %cst_27 = arith.constant 1.000000e-24 : f32
    %73 = vector.broadcast %cst_27 : f32 to vector<1x150xf32>
    %74 = arith.maximumf %72, %73 : vector<1x150xf32>
    %75 = math.rsqrt %74 : vector<1x150xf32>
    %76 = arith.mulf %38, %69 : vector<1x150xf32>
    %77 = arith.mulf %76, %75 : vector<1x150xf32>
    %cst_28 = arith.constant 14.2857141 : f32
    %78 = vector.broadcast %cst_28 : f32 to vector<1x1xf32>
    %79 = arith.mulf %65, %78 : vector<1x1xf32>
    %cst_29 = arith.constant 14.2857141 : f32
    %80 = vector.broadcast %cst_29 : f32 to vector<1x150xf32>
    %81 = arith.mulf %77, %80 : vector<1x150xf32>
    %cst_30 = arith.constant dense<0xFF800000> : vector<1xf32>
    %82 = vector.multi_reduction <maximumf>, %81, %cst_30 [1] : vector<1x150xf32> to vector<1xf32>
    %83 = vector.shape_cast %82 : vector<1xf32> to vector<1x1xf32>
    %84 = arith.maximumf %79, %83 : vector<1x1xf32>
    %85 = arith.subf %79, %84 : vector<1x1xf32>
    %86 = math.exp %85 : vector<1x1xf32>
    %87 = vector.broadcast %84 : vector<1x1xf32> to vector<1x150xf32>
    %88 = arith.subf %81, %87 : vector<1x150xf32>
    %89 = math.exp %88 : vector<1x150xf32>
    %cst_31 = arith.constant dense<0.000000e+00> : vector<1xf32>
    %90 = vector.multi_reduction <add>, %89, %cst_31 [1] : vector<1x150xf32> to vector<1xf32>
    %91 = vector.shape_cast %90 : vector<1xf32> to vector<1x1xf32>
    %92 = arith.addf %86, %91 : vector<1x1xf32>
    %93 = math.log %92 : vector<1x1xf32>
    %94 = arith.addf %84, %93 : vector<1x1xf32>
    %95 = arith.subf %94, %79 : vector<1x1xf32>
    %96 = arith.addf %31, %95 : vector<1x1xf32>
    %c1 = arith.constant 1 : index
    %c0_32 = arith.constant 0 : index
    %c0_33 = arith.constant 0 : index
    %97 = vector.load %arg0[%c1, %c0_32, %c0_33] : memref<8x32x150xf32, #tpu.memory_space<vmem>>, vector<1x32x150xf32>
    %98 = vector.shape_cast %97 : vector<1x32x150xf32> to vector<32x150xf32>
    %c3 = arith.constant 3 : index
    %c0_34 = arith.constant 0 : index
    %c0_35 = arith.constant 0 : index
    %99 = vector.load %arg0[%c3, %c0_34, %c0_35] : memref<8x32x150xf32, #tpu.memory_space<vmem>>, vector<1x32x150xf32>
    %100 = vector.shape_cast %99 : vector<1x32x150xf32> to vector<32x150xf32>
    %c7 = arith.constant 7 : index
    %c0_36 = arith.constant 0 : index
    %c0_37 = arith.constant 0 : index
    %101 = vector.load %arg0[%c7, %c0_36, %c0_37] : memref<8x32x150xf32, #tpu.memory_space<vmem>>, vector<1x32x150xf32>
    %102 = vector.shape_cast %101 : vector<1x32x150xf32> to vector<32x150xf32>
    %103 = vector.extract_strided_slice %29 {offsets = [1, 0], sizes = [1, 150], strides = [1, 1]} : vector<2x150xf32> to vector<1x150xf32>
    %cst_38 = arith.constant dense<0.000000e+00> : vector<32xf32>
    %104 = vector.multi_reduction <add>, %98, %cst_38 [1] : vector<32x150xf32> to vector<32xf32>
    %105 = vector.shape_cast %104 : vector<32xf32> to vector<32x1xf32>
    %cst_39 = arith.constant 0.00666666683 : f32
    %106 = vector.broadcast %cst_39 : f32 to vector<32x1xf32>
    %107 = arith.mulf %105, %106 : vector<32x1xf32>
    %cst_40 = arith.constant dense<0.000000e+00> : vector<32xf32>
    %108 = vector.multi_reduction <add>, %100, %cst_40 [1] : vector<32x150xf32> to vector<32xf32>
    %109 = vector.shape_cast %108 : vector<32xf32> to vector<32x1xf32>
    %cst_41 = arith.constant 0.00666666683 : f32
    %110 = vector.broadcast %cst_41 : f32 to vector<32x1xf32>
    %111 = arith.mulf %109, %110 : vector<32x1xf32>
    %112 = arith.mulf %107, %107 : vector<32x1xf32>
    %cst_42 = arith.constant dense<0.000000e+00> : vector<1xf32>
    %113 = vector.multi_reduction <add>, %112, %cst_42 [0] : vector<32x1xf32> to vector<1xf32>
    %114 = vector.shape_cast %113 : vector<1xf32> to vector<1x1xf32>
    %cst_43 = arith.constant 1.000000e-24 : f32
    %115 = vector.broadcast %cst_43 : f32 to vector<1x1xf32>
    %116 = arith.maximumf %114, %115 : vector<1x1xf32>
    %117 = math.rsqrt %116 : vector<1x1xf32>
    %118 = vector.broadcast %117 : vector<1x1xf32> to vector<32x1xf32>
    %119 = arith.mulf %107, %118 : vector<32x1xf32>
    %120 = arith.mulf %111, %111 : vector<32x1xf32>
    %cst_44 = arith.constant dense<0.000000e+00> : vector<1xf32>
    %121 = vector.multi_reduction <add>, %120, %cst_44 [0] : vector<32x1xf32> to vector<1xf32>
    %122 = vector.shape_cast %121 : vector<1xf32> to vector<1x1xf32>
    %cst_45 = arith.constant 1.000000e-24 : f32
    %123 = vector.broadcast %cst_45 : f32 to vector<1x1xf32>
    %124 = arith.maximumf %122, %123 : vector<1x1xf32>
    %125 = math.rsqrt %124 : vector<1x1xf32>
    %126 = vector.broadcast %125 : vector<1x1xf32> to vector<32x1xf32>
    %127 = arith.mulf %111, %126 : vector<32x1xf32>
    %128 = arith.mulf %119, %127 : vector<32x1xf32>
    %cst_46 = arith.constant dense<0.000000e+00> : vector<1xf32>
    %129 = vector.multi_reduction <add>, %128, %cst_46 [0] : vector<32x1xf32> to vector<1xf32>
    %130 = vector.shape_cast %129 : vector<1xf32> to vector<1x1xf32>
    %131 = vector.broadcast %119 : vector<32x1xf32> to vector<32x150xf32>
    %132 = arith.mulf %131, %102 : vector<32x150xf32>
    %cst_47 = arith.constant dense<0.000000e+00> : vector<150xf32>
    %133 = vector.multi_reduction <add>, %132, %cst_47 [0] : vector<32x150xf32> to vector<150xf32>
    %134 = vector.shape_cast %133 : vector<150xf32> to vector<1x150xf32>
    %135 = arith.mulf %102, %102 : vector<32x150xf32>
    %cst_48 = arith.constant dense<0.000000e+00> : vector<150xf32>
    %136 = vector.multi_reduction <add>, %135, %cst_48 [0] : vector<32x150xf32> to vector<150xf32>
    %137 = vector.shape_cast %136 : vector<150xf32> to vector<1x150xf32>
    %cst_49 = arith.constant 1.000000e-24 : f32
    %138 = vector.broadcast %cst_49 : f32 to vector<1x150xf32>
    %139 = arith.maximumf %137, %138 : vector<1x150xf32>
    %140 = math.rsqrt %139 : vector<1x150xf32>
    %141 = arith.mulf %103, %134 : vector<1x150xf32>
    %142 = arith.mulf %141, %140 : vector<1x150xf32>
    %cst_50 = arith.constant 14.2857141 : f32
    %143 = vector.broadcast %cst_50 : f32 to vector<1x1xf32>
    %144 = arith.mulf %130, %143 : vector<1x1xf32>
    %cst_51 = arith.constant 14.2857141 : f32
    %145 = vector.broadcast %cst_51 : f32 to vector<1x150xf32>
    %146 = arith.mulf %142, %145 : vector<1x150xf32>
    %cst_52 = arith.constant dense<0xFF800000> : vector<1xf32>
    %147 = vector.multi_reduction <maximumf>, %146, %cst_52 [1] : vector<1x150xf32> to vector<1xf32>
    %148 = vector.shape_cast %147 : vector<1xf32> to vector<1x1xf32>
    %149 = arith.maximumf %144, %148 : vector<1x1xf32>
    %150 = arith.subf %144, %149 : vector<1x1xf32>
    %151 = math.exp %150 : vector<1x1xf32>
    %152 = vector.broadcast %149 : vector<1x1xf32> to vector<1x150xf32>
    %153 = arith.subf %146, %152 : vector<1x150xf32>
    %154 = math.exp %153 : vector<1x150xf32>
    %cst_53 = arith.constant dense<0.000000e+00> : vector<1xf32>
    %155 = vector.multi_reduction <add>, %154, %cst_53 [1] : vector<1x150xf32> to vector<1xf32>
    %156 = vector.shape_cast %155 : vector<1xf32> to vector<1x1xf32>
    %157 = arith.addf %151, %156 : vector<1x1xf32>
    %158 = math.log %157 : vector<1x1xf32>
    %159 = arith.addf %149, %158 : vector<1x1xf32>
    %160 = arith.subf %159, %144 : vector<1x1xf32>
    %161 = arith.addf %96, %160 : vector<1x1xf32>
    %cst_54 = arith.constant 5.000000e-01 : f32
    %162 = vector.broadcast %cst_54 : f32 to vector<1x1xf32>
    %163 = arith.mulf %161, %162 : vector<1x1xf32>
    %cst_55 = arith.constant 0.000000e+00 : f32
    %164 = vector.broadcast %cst_55 : f32 to vector<1x1xf32>
    %c4 = arith.constant 4 : index
    %c0_56 = arith.constant 0 : index
    %c0_57 = arith.constant 0 : index
    %165 = vector.load %arg0[%c4, %c0_56, %c0_57] : memref<8x32x150xf32, #tpu.memory_space<vmem>>, vector<1x32x150xf32>
    %166 = vector.shape_cast %165 : vector<1x32x150xf32> to vector<32x150xf32>
    %c6_58 = arith.constant 6 : index
    %c0_59 = arith.constant 0 : index
    %c0_60 = arith.constant 0 : index
    %167 = vector.load %arg0[%c6_58, %c0_59, %c0_60] : memref<8x32x150xf32, #tpu.memory_space<vmem>>, vector<1x32x150xf32>
    %168 = vector.shape_cast %167 : vector<1x32x150xf32> to vector<32x150xf32>
    %c2_61 = arith.constant 2 : index
    %c0_62 = arith.constant 0 : index
    %c0_63 = arith.constant 0 : index
    %169 = vector.load %arg0[%c2_61, %c0_62, %c0_63] : memref<8x32x150xf32, #tpu.memory_space<vmem>>, vector<1x32x150xf32>
    %170 = vector.shape_cast %169 : vector<1x32x150xf32> to vector<32x150xf32>
    %171 = vector.extract_strided_slice %30 {offsets = [0, 0], sizes = [1, 150], strides = [1, 1]} : vector<2x150xf32> to vector<1x150xf32>
    %cst_64 = arith.constant dense<0.000000e+00> : vector<32xf32>
    %172 = vector.multi_reduction <add>, %166, %cst_64 [1] : vector<32x150xf32> to vector<32xf32>
    %173 = vector.shape_cast %172 : vector<32xf32> to vector<32x1xf32>
    %cst_65 = arith.constant 0.00666666683 : f32
    %174 = vector.broadcast %cst_65 : f32 to vector<32x1xf32>
    %175 = arith.mulf %173, %174 : vector<32x1xf32>
    %cst_66 = arith.constant dense<0.000000e+00> : vector<32xf32>
    %176 = vector.multi_reduction <add>, %168, %cst_66 [1] : vector<32x150xf32> to vector<32xf32>
    %177 = vector.shape_cast %176 : vector<32xf32> to vector<32x1xf32>
    %cst_67 = arith.constant 0.00666666683 : f32
    %178 = vector.broadcast %cst_67 : f32 to vector<32x1xf32>
    %179 = arith.mulf %177, %178 : vector<32x1xf32>
    %180 = arith.mulf %175, %175 : vector<32x1xf32>
    %cst_68 = arith.constant dense<0.000000e+00> : vector<1xf32>
    %181 = vector.multi_reduction <add>, %180, %cst_68 [0] : vector<32x1xf32> to vector<1xf32>
    %182 = vector.shape_cast %181 : vector<1xf32> to vector<1x1xf32>
    %cst_69 = arith.constant 1.000000e-24 : f32
    %183 = vector.broadcast %cst_69 : f32 to vector<1x1xf32>
    %184 = arith.maximumf %182, %183 : vector<1x1xf32>
    %185 = math.rsqrt %184 : vector<1x1xf32>
    %186 = vector.broadcast %185 : vector<1x1xf32> to vector<32x1xf32>
    %187 = arith.mulf %175, %186 : vector<32x1xf32>
    %188 = arith.mulf %179, %179 : vector<32x1xf32>
    %cst_70 = arith.constant dense<0.000000e+00> : vector<1xf32>
    %189 = vector.multi_reduction <add>, %188, %cst_70 [0] : vector<32x1xf32> to vector<1xf32>
    %190 = vector.shape_cast %189 : vector<1xf32> to vector<1x1xf32>
    %cst_71 = arith.constant 1.000000e-24 : f32
    %191 = vector.broadcast %cst_71 : f32 to vector<1x1xf32>
    %192 = arith.maximumf %190, %191 : vector<1x1xf32>
    %193 = math.rsqrt %192 : vector<1x1xf32>
    %194 = vector.broadcast %193 : vector<1x1xf32> to vector<32x1xf32>
    %195 = arith.mulf %179, %194 : vector<32x1xf32>
    %196 = arith.mulf %187, %195 : vector<32x1xf32>
    %cst_72 = arith.constant dense<0.000000e+00> : vector<1xf32>
    %197 = vector.multi_reduction <add>, %196, %cst_72 [0] : vector<32x1xf32> to vector<1xf32>
    %198 = vector.shape_cast %197 : vector<1xf32> to vector<1x1xf32>
    %199 = vector.broadcast %187 : vector<32x1xf32> to vector<32x150xf32>
    %200 = arith.mulf %199, %170 : vector<32x150xf32>
    %cst_73 = arith.constant dense<0.000000e+00> : vector<150xf32>
    %201 = vector.multi_reduction <add>, %200, %cst_73 [0] : vector<32x150xf32> to vector<150xf32>
    %202 = vector.shape_cast %201 : vector<150xf32> to vector<1x150xf32>
    %203 = arith.mulf %170, %170 : vector<32x150xf32>
    %cst_74 = arith.constant dense<0.000000e+00> : vector<150xf32>
    %204 = vector.multi_reduction <add>, %203, %cst_74 [0] : vector<32x150xf32> to vector<150xf32>
    %205 = vector.shape_cast %204 : vector<150xf32> to vector<1x150xf32>
    %cst_75 = arith.constant 1.000000e-24 : f32
    %206 = vector.broadcast %cst_75 : f32 to vector<1x150xf32>
    %207 = arith.maximumf %205, %206 : vector<1x150xf32>
    %208 = math.rsqrt %207 : vector<1x150xf32>
    %209 = arith.mulf %171, %202 : vector<1x150xf32>
    %210 = arith.mulf %209, %208 : vector<1x150xf32>
    %cst_76 = arith.constant 14.2857141 : f32
    %211 = vector.broadcast %cst_76 : f32 to vector<1x1xf32>
    %212 = arith.mulf %198, %211 : vector<1x1xf32>
    %cst_77 = arith.constant 14.2857141 : f32
    %213 = vector.broadcast %cst_77 : f32 to vector<1x150xf32>
    %214 = arith.mulf %210, %213 : vector<1x150xf32>
    %cst_78 = arith.constant dense<0xFF800000> : vector<1xf32>
    %215 = vector.multi_reduction <maximumf>, %214, %cst_78 [1] : vector<1x150xf32> to vector<1xf32>
    %216 = vector.shape_cast %215 : vector<1xf32> to vector<1x1xf32>
    %217 = arith.maximumf %212, %216 : vector<1x1xf32>
    %218 = arith.subf %212, %217 : vector<1x1xf32>
    %219 = math.exp %218 : vector<1x1xf32>
    %220 = vector.broadcast %217 : vector<1x1xf32> to vector<1x150xf32>
    %221 = arith.subf %214, %220 : vector<1x150xf32>
    %222 = math.exp %221 : vector<1x150xf32>
    %cst_79 = arith.constant dense<0.000000e+00> : vector<1xf32>
    %223 = vector.multi_reduction <add>, %222, %cst_79 [1] : vector<1x150xf32> to vector<1xf32>
    %224 = vector.shape_cast %223 : vector<1xf32> to vector<1x1xf32>
    %225 = arith.addf %219, %224 : vector<1x1xf32>
    %226 = math.log %225 : vector<1x1xf32>
    %227 = arith.addf %217, %226 : vector<1x1xf32>
    %228 = arith.subf %227, %212 : vector<1x1xf32>
    %229 = arith.addf %164, %228 : vector<1x1xf32>
    %c5 = arith.constant 5 : index
    %c0_80 = arith.constant 0 : index
    %c0_81 = arith.constant 0 : index
    %230 = vector.load %arg0[%c5, %c0_80, %c0_81] : memref<8x32x150xf32, #tpu.memory_space<vmem>>, vector<1x32x150xf32>
    %231 = vector.shape_cast %230 : vector<1x32x150xf32> to vector<32x150xf32>
    %c7_82 = arith.constant 7 : index
    %c0_83 = arith.constant 0 : index
    %c0_84 = arith.constant 0 : index
    %232 = vector.load %arg0[%c7_82, %c0_83, %c0_84] : memref<8x32x150xf32, #tpu.memory_space<vmem>>, vector<1x32x150xf32>
    %233 = vector.shape_cast %232 : vector<1x32x150xf32> to vector<32x150xf32>
    %c3_85 = arith.constant 3 : index
    %c0_86 = arith.constant 0 : index
    %c0_87 = arith.constant 0 : index
    %234 = vector.load %arg0[%c3_85, %c0_86, %c0_87] : memref<8x32x150xf32, #tpu.memory_space<vmem>>, vector<1x32x150xf32>
    %235 = vector.shape_cast %234 : vector<1x32x150xf32> to vector<32x150xf32>
    %236 = vector.extract_strided_slice %30 {offsets = [1, 0], sizes = [1, 150], strides = [1, 1]} : vector<2x150xf32> to vector<1x150xf32>
    %cst_88 = arith.constant dense<0.000000e+00> : vector<32xf32>
    %237 = vector.multi_reduction <add>, %231, %cst_88 [1] : vector<32x150xf32> to vector<32xf32>
    %238 = vector.shape_cast %237 : vector<32xf32> to vector<32x1xf32>
    %cst_89 = arith.constant 0.00666666683 : f32
    %239 = vector.broadcast %cst_89 : f32 to vector<32x1xf32>
    %240 = arith.mulf %238, %239 : vector<32x1xf32>
    %cst_90 = arith.constant dense<0.000000e+00> : vector<32xf32>
    %241 = vector.multi_reduction <add>, %233, %cst_90 [1] : vector<32x150xf32> to vector<32xf32>
    %242 = vector.shape_cast %241 : vector<32xf32> to vector<32x1xf32>
    %cst_91 = arith.constant 0.00666666683 : f32
    %243 = vector.broadcast %cst_91 : f32 to vector<32x1xf32>
    %244 = arith.mulf %242, %243 : vector<32x1xf32>
    %245 = arith.mulf %240, %240 : vector<32x1xf32>
    %cst_92 = arith.constant dense<0.000000e+00> : vector<1xf32>
    %246 = vector.multi_reduction <add>, %245, %cst_92 [0] : vector<32x1xf32> to vector<1xf32>
    %247 = vector.shape_cast %246 : vector<1xf32> to vector<1x1xf32>
    %cst_93 = arith.constant 1.000000e-24 : f32
    %248 = vector.broadcast %cst_93 : f32 to vector<1x1xf32>
    %249 = arith.maximumf %247, %248 : vector<1x1xf32>
    %250 = math.rsqrt %249 : vector<1x1xf32>
    %251 = vector.broadcast %250 : vector<1x1xf32> to vector<32x1xf32>
    %252 = arith.mulf %240, %251 : vector<32x1xf32>
    %253 = arith.mulf %244, %244 : vector<32x1xf32>
    %cst_94 = arith.constant dense<0.000000e+00> : vector<1xf32>
    %254 = vector.multi_reduction <add>, %253, %cst_94 [0] : vector<32x1xf32> to vector<1xf32>
    %255 = vector.shape_cast %254 : vector<1xf32> to vector<1x1xf32>
    %cst_95 = arith.constant 1.000000e-24 : f32
    %256 = vector.broadcast %cst_95 : f32 to vector<1x1xf32>
    %257 = arith.maximumf %255, %256 : vector<1x1xf32>
    %258 = math.rsqrt %257 : vector<1x1xf32>
    %259 = vector.broadcast %258 : vector<1x1xf32> to vector<32x1xf32>
    %260 = arith.mulf %244, %259 : vector<32x1xf32>
    %261 = arith.mulf %252, %260 : vector<32x1xf32>
    %cst_96 = arith.constant dense<0.000000e+00> : vector<1xf32>
    %262 = vector.multi_reduction <add>, %261, %cst_96 [0] : vector<32x1xf32> to vector<1xf32>
    %263 = vector.shape_cast %262 : vector<1xf32> to vector<1x1xf32>
    %264 = vector.broadcast %252 : vector<32x1xf32> to vector<32x150xf32>
    %265 = arith.mulf %264, %235 : vector<32x150xf32>
    %cst_97 = arith.constant dense<0.000000e+00> : vector<150xf32>
    %266 = vector.multi_reduction <add>, %265, %cst_97 [0] : vector<32x150xf32> to vector<150xf32>
    %267 = vector.shape_cast %266 : vector<150xf32> to vector<1x150xf32>
    %268 = arith.mulf %235, %235 : vector<32x150xf32>
    %cst_98 = arith.constant dense<0.000000e+00> : vector<150xf32>
    %269 = vector.multi_reduction <add>, %268, %cst_98 [0] : vector<32x150xf32> to vector<150xf32>
    %270 = vector.shape_cast %269 : vector<150xf32> to vector<1x150xf32>
    %cst_99 = arith.constant 1.000000e-24 : f32
    %271 = vector.broadcast %cst_99 : f32 to vector<1x150xf32>
    %272 = arith.maximumf %270, %271 : vector<1x150xf32>
    %273 = math.rsqrt %272 : vector<1x150xf32>
    %274 = arith.mulf %236, %267 : vector<1x150xf32>
    %275 = arith.mulf %274, %273 : vector<1x150xf32>
    %cst_100 = arith.constant 14.2857141 : f32
    %276 = vector.broadcast %cst_100 : f32 to vector<1x1xf32>
    %277 = arith.mulf %263, %276 : vector<1x1xf32>
    %cst_101 = arith.constant 14.2857141 : f32
    %278 = vector.broadcast %cst_101 : f32 to vector<1x150xf32>
    %279 = arith.mulf %275, %278 : vector<1x150xf32>
    %cst_102 = arith.constant dense<0xFF800000> : vector<1xf32>
    %280 = vector.multi_reduction <maximumf>, %279, %cst_102 [1] : vector<1x150xf32> to vector<1xf32>
    %281 = vector.shape_cast %280 : vector<1xf32> to vector<1x1xf32>
    %282 = arith.maximumf %277, %281 : vector<1x1xf32>
    %283 = arith.subf %277, %282 : vector<1x1xf32>
    %284 = math.exp %283 : vector<1x1xf32>
    %285 = vector.broadcast %282 : vector<1x1xf32> to vector<1x150xf32>
    %286 = arith.subf %279, %285 : vector<1x150xf32>
    %287 = math.exp %286 : vector<1x150xf32>
    %cst_103 = arith.constant dense<0.000000e+00> : vector<1xf32>
    %288 = vector.multi_reduction <add>, %287, %cst_103 [1] : vector<1x150xf32> to vector<1xf32>
    %289 = vector.shape_cast %288 : vector<1xf32> to vector<1x1xf32>
    %290 = arith.addf %284, %289 : vector<1x1xf32>
    %291 = math.log %290 : vector<1x1xf32>
    %292 = arith.addf %282, %291 : vector<1x1xf32>
    %293 = arith.subf %292, %277 : vector<1x1xf32>
    %294 = arith.addf %229, %293 : vector<1x1xf32>
    %cst_104 = arith.constant 5.000000e-01 : f32
    %295 = vector.broadcast %cst_104 : f32 to vector<1x1xf32>
    %296 = arith.mulf %294, %295 : vector<1x1xf32>
    %297 = arith.addf %163, %296 : vector<1x1xf32>
    %298 = vector.extract_strided_slice %0 {offsets = [8, 0], sizes = [4, 128], strides = [1, 1]} : vector<18x256xf32> to vector<4x128xf32>
    %299 = vector.extract_strided_slice %0 {offsets = [12, 0], sizes = [6, 128], strides = [1, 1]} : vector<18x256xf32> to vector<6x128xf32>
    %cst_105 = arith.constant 1.000000e+00 : f32
    %300 = vector.broadcast %cst_105 : f32 to vector<4x128xf32>
    %301 = arith.subf %300, %298 : vector<4x128xf32>
    %cst_106 = arith.constant 1.000000e+00 : f32
    %302 = vector.broadcast %cst_106 : f32 to vector<4x128xf32>
    %303 = arith.subf %302, %298 : vector<4x128xf32>
    %304 = arith.mulf %301, %303 : vector<4x128xf32>
    %305 = vector.shape_cast %304 : vector<4x128xf32> to vector<1x4x128xf32>
    %cst_107 = arith.constant dense<0.000000e+00> : vector<1xf32>
    %306 = vector.multi_reduction <add>, %305, %cst_107 [1, 2] : vector<1x4x128xf32> to vector<1xf32>
    %307 = vector.shape_cast %306 : vector<1xf32> to vector<1x1x1xf32>
    %308 = vector.extract %307[0, 0, 0] : f32 from vector<1x1x1xf32>
    %309 = vector.broadcast %308 : f32 to vector<1x1xf32>
    %cst_108 = arith.constant 5.120000e+02 : f32
    %310 = vector.broadcast %cst_108 : f32 to vector<1x1xf32>
    %311 = arith.divf %309, %310 : vector<1x1xf32>
    %312 = arith.mulf %299, %299 : vector<6x128xf32>
    %313 = vector.shape_cast %312 : vector<6x128xf32> to vector<1x6x128xf32>
    %cst_109 = arith.constant dense<0.000000e+00> : vector<1xf32>
    %314 = vector.multi_reduction <add>, %313, %cst_109 [1, 2] : vector<1x6x128xf32> to vector<1xf32>
    %315 = vector.shape_cast %314 : vector<1xf32> to vector<1x1x1xf32>
    %316 = vector.extract %315[0, 0, 0] : f32 from vector<1x1x1xf32>
    %317 = vector.broadcast %316 : f32 to vector<1x1xf32>
    %cst_110 = arith.constant 7.680000e+02 : f32
    %318 = vector.broadcast %cst_110 : f32 to vector<1x1xf32>
    %319 = arith.divf %317, %318 : vector<1x1xf32>
    %320 = arith.addf %311, %319 : vector<1x1xf32>
    %cst_111 = arith.constant 0.000000e+00 : f32
    %321 = vector.broadcast %cst_111 : f32 to vector<11x768xf32>
    %cst_112 = arith.constant 0.000000e+00 : f32
    %322 = vector.broadcast %cst_112 : f32 to vector<11x768xf32>
    %cst_113 = arith.constant 0.000000e+00 : f32
    %323 = vector.broadcast %cst_113 : f32 to vector<1x768xf32>
    %c0_114 = arith.constant 0 : index
    %c0_115 = arith.constant 0 : index
    %c0_116 = arith.constant 0 : index
    %324 = vector.load %arg2[%c0_114, %c0_115, %c0_116] : memref<4x11x768xf32, #tpu.memory_space<vmem>>, vector<1x11x768xf32>
    %325 = vector.shape_cast %324 : vector<1x11x768xf32> to vector<11x768xf32>
    %c2_117 = arith.constant 2 : index
    %c0_118 = arith.constant 0 : index
    %c0_119 = arith.constant 0 : index
    %326 = vector.load %arg2[%c2_117, %c0_118, %c0_119] : memref<4x11x768xf32, #tpu.memory_space<vmem>>, vector<1x11x768xf32>
    %327 = vector.shape_cast %326 : vector<1x11x768xf32> to vector<11x768xf32>
    %328 = vector.extract_strided_slice %325 {offsets = [6, 0], sizes = [1, 768], strides = [1, 1]} : vector<11x768xf32> to vector<1x768xf32>
    %329 = vector.extract_strided_slice %327 {offsets = [6, 0], sizes = [1, 768], strides = [1, 1]} : vector<11x768xf32> to vector<1x768xf32>
    %330 = vector.broadcast %328 : vector<1x768xf32> to vector<11x768xf32>
    %331 = arith.subf %330, %325 : vector<11x768xf32>
    %332 = arith.mulf %331, %331 : vector<11x768xf32>
    %333 = arith.addf %321, %332 : vector<11x768xf32>
    %334 = vector.broadcast %329 : vector<1x768xf32> to vector<11x768xf32>
    %335 = arith.subf %334, %327 : vector<11x768xf32>
    %336 = math.absf %335 : vector<11x768xf32>
    %337 = arith.addf %322, %336 : vector<11x768xf32>
    %338 = arith.subf %328, %329 : vector<1x768xf32>
    %339 = arith.mulf %338, %338 : vector<1x768xf32>
    %340 = arith.addf %323, %339 : vector<1x768xf32>
    %c1_120 = arith.constant 1 : index
    %c0_121 = arith.constant 0 : index
    %c0_122 = arith.constant 0 : index
    %341 = vector.load %arg2[%c1_120, %c0_121, %c0_122] : memref<4x11x768xf32, #tpu.memory_space<vmem>>, vector<1x11x768xf32>
    %342 = vector.shape_cast %341 : vector<1x11x768xf32> to vector<11x768xf32>
    %c3_123 = arith.constant 3 : index
    %c0_124 = arith.constant 0 : index
    %c0_125 = arith.constant 0 : index
    %343 = vector.load %arg2[%c3_123, %c0_124, %c0_125] : memref<4x11x768xf32, #tpu.memory_space<vmem>>, vector<1x11x768xf32>
    %344 = vector.shape_cast %343 : vector<1x11x768xf32> to vector<11x768xf32>
    %345 = vector.extract_strided_slice %342 {offsets = [6, 0], sizes = [1, 768], strides = [1, 1]} : vector<11x768xf32> to vector<1x768xf32>
    %346 = vector.extract_strided_slice %344 {offsets = [6, 0], sizes = [1, 768], strides = [1, 1]} : vector<11x768xf32> to vector<1x768xf32>
    %347 = vector.broadcast %345 : vector<1x768xf32> to vector<11x768xf32>
    %348 = arith.subf %347, %342 : vector<11x768xf32>
    %349 = arith.mulf %348, %348 : vector<11x768xf32>
    %350 = arith.addf %333, %349 : vector<11x768xf32>
    %351 = vector.broadcast %346 : vector<1x768xf32> to vector<11x768xf32>
    %352 = arith.subf %351, %344 : vector<11x768xf32>
    %353 = math.absf %352 : vector<11x768xf32>
    %354 = arith.addf %337, %353 : vector<11x768xf32>
    %355 = arith.subf %345, %346 : vector<1x768xf32>
    %356 = arith.mulf %355, %355 : vector<1x768xf32>
    %357 = arith.addf %340, %356 : vector<1x768xf32>
    %cst_126 = arith.constant 0.000000e+00 : f32
    %358 = vector.broadcast %cst_126 : f32 to vector<11x768xf32>
    %359 = arith.subf %358, %350 : vector<11x768xf32>
    %cst_127 = arith.constant 5.000000e-01 : f32
    %360 = vector.broadcast %cst_127 : f32 to vector<11x768xf32>
    %361 = arith.mulf %359, %360 : vector<11x768xf32>
    %362 = math.exp %361 : vector<11x768xf32>
    %363 = arith.mulf %362, %354 : vector<11x768xf32>
    %364 = vector.shape_cast %363 : vector<11x768xf32> to vector<1x11x768xf32>
    %cst_128 = arith.constant dense<0.000000e+00> : vector<1xf32>
    %365 = vector.multi_reduction <add>, %364, %cst_128 [1, 2] : vector<1x11x768xf32> to vector<1xf32>
    %366 = vector.shape_cast %365 : vector<1xf32> to vector<1x1x1xf32>
    %367 = vector.extract %366[0, 0, 0] : f32 from vector<1x1x1xf32>
    %368 = vector.broadcast %367 : f32 to vector<1x1xf32>
    %cst_129 = arith.constant 5.000000e-01 : f32
    %369 = vector.broadcast %cst_129 : f32 to vector<1x1xf32>
    %370 = arith.mulf %368, %369 : vector<1x1xf32>
    %371 = vector.shape_cast %357 : vector<1x768xf32> to vector<1x1x768xf32>
    %cst_130 = arith.constant dense<0.000000e+00> : vector<1xf32>
    %372 = vector.multi_reduction <add>, %371, %cst_130 [1, 2] : vector<1x1x768xf32> to vector<1xf32>
    %373 = vector.shape_cast %372 : vector<1xf32> to vector<1x1x1xf32>
    %374 = vector.extract %373[0, 0, 0] : f32 from vector<1x1x1xf32>
    %375 = vector.broadcast %374 : f32 to vector<1x1xf32>
    %cst_131 = arith.constant 5.000000e-02 : f32
    %376 = vector.broadcast %cst_131 : f32 to vector<1x1xf32>
    %377 = arith.mulf %376, %375 : vector<1x1xf32>
    %378 = arith.addf %370, %377 : vector<1x1xf32>
    %cst_132 = arith.constant 1.000000e+00 : f32
    %379 = vector.broadcast %cst_132 : f32 to vector<1x1xf32>
    %380 = arith.mulf %378, %379 : vector<1x1xf32>
    %cst_133 = arith.constant 0.00999999977 : f32
    %381 = vector.broadcast %cst_133 : f32 to vector<1x1xf32>
    %382 = arith.mulf %381, %297 : vector<1x1xf32>
    %383 = arith.addf %28, %382 : vector<1x1xf32>
    %384 = arith.addf %383, %380 : vector<1x1xf32>
    %cst_134 = arith.constant 5.000000e-01 : f32
    %385 = vector.broadcast %cst_134 : f32 to vector<1x1xf32>
    %386 = arith.mulf %385, %320 : vector<1x1xf32>
    %387 = arith.addf %384, %386 : vector<1x1xf32>
    %388 = tpu.iota {dimensions = array<i32: 1>} : vector<1x128xi32>
    %c0_i32 = arith.constant 0 : i32
    %389 = vector.broadcast %c0_i32 : i32 to vector<1x128xi32>
    %390 = arith.cmpi eq, %388, %389 : vector<1x128xi32>
    %cst_135 = arith.constant 0.000000e+00 : f32
    %391 = vector.shape_cast %28 : vector<1x1xf32> to vector<1x1xf32>
    %392 = vector.broadcast %391 : vector<1x1xf32> to vector<1x128xf32>
    %393 = vector.broadcast %cst_135 : f32 to vector<1x128xf32>
    %394 = arith.select %390, %392, %393 : vector<1x128xi1>, vector<1x128xf32>
    %c1_i32 = arith.constant 1 : i32
    %395 = vector.broadcast %c1_i32 : i32 to vector<1x128xi32>
    %396 = arith.cmpi eq, %388, %395 : vector<1x128xi32>
    %cst_136 = arith.constant 0.000000e+00 : f32
    %397 = vector.shape_cast %297 : vector<1x1xf32> to vector<1x1xf32>
    %398 = vector.broadcast %397 : vector<1x1xf32> to vector<1x128xf32>
    %399 = vector.broadcast %cst_136 : f32 to vector<1x128xf32>
    %400 = arith.select %396, %398, %399 : vector<1x128xi1>, vector<1x128xf32>
    %401 = arith.addf %394, %400 : vector<1x128xf32>
    %c2_i32 = arith.constant 2 : i32
    %402 = vector.broadcast %c2_i32 : i32 to vector<1x128xi32>
    %403 = arith.cmpi eq, %388, %402 : vector<1x128xi32>
    %cst_137 = arith.constant 0.000000e+00 : f32
    %404 = vector.shape_cast %380 : vector<1x1xf32> to vector<1x1xf32>
    %405 = vector.broadcast %404 : vector<1x1xf32> to vector<1x128xf32>
    %406 = vector.broadcast %cst_137 : f32 to vector<1x128xf32>
    %407 = arith.select %403, %405, %406 : vector<1x128xi1>, vector<1x128xf32>
    %408 = arith.addf %401, %407 : vector<1x128xf32>
    %c3_i32 = arith.constant 3 : i32
    %409 = vector.broadcast %c3_i32 : i32 to vector<1x128xi32>
    %410 = arith.cmpi eq, %388, %409 : vector<1x128xi32>
    %cst_138 = arith.constant 0.000000e+00 : f32
    %411 = vector.shape_cast %320 : vector<1x1xf32> to vector<1x1xf32>
    %412 = vector.broadcast %411 : vector<1x1xf32> to vector<1x128xf32>
    %413 = vector.broadcast %cst_138 : f32 to vector<1x128xf32>
    %414 = arith.select %410, %412, %413 : vector<1x128xi1>, vector<1x128xf32>
    %415 = arith.addf %408, %414 : vector<1x128xf32>
    %c4_i32 = arith.constant 4 : i32
    %416 = vector.broadcast %c4_i32 : i32 to vector<1x128xi32>
    %417 = arith.cmpi eq, %388, %416 : vector<1x128xi32>
    %cst_139 = arith.constant 0.000000e+00 : f32
    %418 = vector.shape_cast %387 : vector<1x1xf32> to vector<1x1xf32>
    %419 = vector.broadcast %418 : vector<1x1xf32> to vector<1x128xf32>
    %420 = vector.broadcast %cst_139 : f32 to vector<1x128xf32>
    %421 = arith.select %417, %419, %420 : vector<1x128xi1>, vector<1x128xf32>
    %422 = arith.addf %415, %421 : vector<1x128xf32>
    %c0_140 = arith.constant 0 : index
    %c0_141 = arith.constant 0 : index
    %423 = vector.load %arg3[%c0_140, %c0_141] : memref<1x128xf32, #tpu.memory_space<vmem>>, vector<1x128xf32>
    tpu.vector_store %arg3[%c0_140, %c0_141], %422 {strides = array<i32>} : memref<1x128xf32, #tpu.memory_space<vmem>>, vector<1x128xf32>,
    return
  }
}

</mosaic_0001>

<llo_original>
// kernel: total_loss_15.1
$region0: #{total_loss_15.1}
  #allocation0 [shape = 'u32[]', space=smem, size = 0x4, offset = 0x4, fixed_abs, tag = 'smem constant byte address 0x4 - core index']
  #allocation1 [shape = 'u32[144,128]{1,0:T(1,128)}', space=vmem, size = 0x12000, scoped, tag = 'internal scratch']
  %s0 = inlined_call_operand.vmem [shape: f32[8,32,150], index: 0, kind: input, shape index: {}]
  %s1 = inlined_call_operand.vmem [shape: f32[18,256], index: 1, kind: input, shape index: {}]
  %s2 = inlined_call_operand.vmem [shape: f32[4,11,768], index: 2, kind: input, shape index: {}]
  %s3 = inlined_call_operand.vmem [shape: f32[1,128], index: 3, kind: output, shape index: {}]
  %s4 = sld [smem:[#allocation0]]
  $region22: #{total_loss_15.1} parent=0
    _
  %s6 = ssub.s32 1, %s4
  %s7 = scalar_select 0, %s6, %s4
  // Predicated region
  $region2: #{total_loss_15.1} parent=0 // pred_check
    _
  $region3: #{total_loss_15.1} parent=0 // pred_check_branch
    %9 = sbr.rel (0) target = $region5
  $region4: #{total_loss_15.1} parent=0 // pred_region
    _
  $region5: #{total_loss_15.1} parent=0 // pred_fallthru
    _
  // Predicated region
  $region6: #{total_loss_15.1} parent=0 // pred_check
    _
  $region7: #{total_loss_15.1} parent=0 // pred_check_branch
    %11 = sbr.rel (0) target = $region9
  $region8: #{total_loss_15.1} parent=0 // pred_region
    _
  $region9: #{total_loss_15.1} parent=0 // pred_fallthru
    _
  // Predicated region
  $region10: #{total_loss_15.1} parent=0 // pred_check
    _
  $region11: #{total_loss_15.1} parent=0 // pred_check_branch
    %13 = sbr.rel (0) target = $region13
  $region12: #{total_loss_15.1} parent=0 // pred_region
    _
  $region13: #{total_loss_15.1} parent=0 // pred_fallthru
    _
  %v14 = vld [vmem:[%s1] sm:$0xff]
  %v15 = vld [vmem:[%s1 + $0x8] sm:$0xff]
  %v16 = vld [vmem:[%s1 + $0x10] sm:$0xff]
  %v17 = vld [vmem:[%s1 + $0x20] sm:$0x3]
  %vm18 = vcmask 27650
  %v19 = vsel %vm18, %v14, 0.0
  %20 = vadd.xlane.f32.xlu0 %v19
  %v21 = vpop.xlane.xlu0 %20
  %v22 = vrcp.pop %v21
  %v23 = vmul.f32 %v14, %v22
  %v24 = vlog2.pop %v14
  %v25 = vmul.f32 %v24, 0.6931472
  %v26 = vmax.f32 %v25, -100.0
  %v27 = vsub.f32 1.0, %v14
  %v28 = vlog2.pop %v27
  %v29 = vmul.f32 %v28, 0.6931472
  %v30 = vmax.f32 %v29, -100.0
  %v32 = vrot.slane %v26, 6
  %v34 = vmul.f32 %v23, %v32
  %v35 = vsub.f32 1.0, %v23
  %v37 = vrot.slane %v30, 6
  %v39 = vmul.f32 %v35, %v37
  %v40 = vadd.f32 %v34, %v39
  %v41 = vsub.f32 0.0, %v40
  %v43 = vrot.slane %v41, 2
  %vm45 = vcmask 25600
  %v46 = vsel %vm45, %v43, 0.0
  %47 = vadd.xlane.f32.xlu0 %v46
  %v48 = vpop.xlane.xlu0 %47
  %v49 = vrot.slane %v48, 4
  %v50 = vadd.f32 %v48, %v49
  %v51 = vrot.slane %v50, 2
  %v52 = vadd.f32 %v50, %v51
  %v53 = vrot.slane %v52, 1
  %v54 = vadd.f32 %v52, %v53
  %s55 = vtos %v54
  %v56 = vstv %s55
  %v57 = vrcp.pop 8.0
  %v58 = vmul.f32 %v56, %v57
  %v59 = vld [vmem:[%s0] sm:$0xff]
  %v60 = vld [vmem:[%s0 + $0x8] sm:$0xff]
  %v61 = vld [vmem:[%s0 + $0x10] sm:$0xff]
  %v62 = vld [vmem:[%s0 + $0x18] sm:$0xff]
  %v63 = vld [vmem:[%s0 + $0x20] sm:$0xff]
  %v64 = vld [vmem:[%s0 + $0x28] sm:$0xff]
  %v65 = vld [vmem:[%s0 + $0x30] sm:$0xff]
  %v66 = vld [vmem:[%s0 + $0x38] sm:$0xff]
  %s67 = scalar_lea.vmem %s0, 128
  %v68 = vld [vmem:[%s67] sm:$0xff]
  %v69 = vld [vmem:[%s67 + $0x8] sm:$0xff]
  %v70 = vld [vmem:[%s67 + $0x10] sm:$0xff]
  %v71 = vld [vmem:[%s67 + $0x18] sm:$0xff]
  %v72 = vld [vmem:[%s67 + $0x20] sm:$0xff]
  %v73 = vld [vmem:[%s67 + $0x28] sm:$0xff]
  %v74 = vld [vmem:[%s67 + $0x30] sm:$0xff]
  %v75 = vld [vmem:[%s67 + $0x38] sm:$0xff]
  %s76 = scalar_lea.vmem %s0, 384
  %v77 = vld [vmem:[%s76] sm:$0xff]
  %v78 = vld [vmem:[%s76 + $0x8] sm:$0xff]
  %v79 = vld [vmem:[%s76 + $0x10] sm:$0xff]
  %v80 = vld [vmem:[%s76 + $0x18] sm:$0xff]
  %v81 = vld [vmem:[%s76 + $0x20] sm:$0xff]
  %v82 = vld [vmem:[%s76 + $0x28] sm:$0xff]
  %v83 = vld [vmem:[%s76 + $0x30] sm:$0xff]
  %v84 = vld [vmem:[%s76 + $0x38] sm:$0xff]
  %vm85 = vcmask 179200
  %v86 = vsel %vm85, %v60, 0.0
  %v87 = vadd.f32 %v59, %v86
  %88 = vadd.xlane.f32.xlu0 %v87
  %v89 = vpop.xlane.xlu0 %88
  %v90 = vsel %vm85, %v62, 0.0
  %v91 = vadd.f32 %v61, %v90
  %92 = vadd.xlane.f32.xlu0 %v91
  %v93 = vpop.xlane.xlu0 %92
  %v94 = vsel %vm85, %v64, 0.0
  %v95 = vadd.f32 %v63, %v94
  %96 = vadd.xlane.f32.xlu0 %v95
  %v97 = vpop.xlane.xlu0 %96
  %v98 = vsel %vm85, %v66, 0.0
  %v99 = vadd.f32 %v65, %v98
  %100 = vadd.xlane.f32.xlu0 %v99
  %v101 = vpop.xlane.xlu0 %100
  %v102 = vmul.f32 %v89, 0.006666667
  %v103 = vmul.f32 %v93, 0.006666667
  %v104 = vmul.f32 %v97, 0.006666667
  %v105 = vmul.f32 %v101, 0.006666667
  %v106 = vsel %vm85, %v69, 0.0
  %v107 = vadd.f32 %v68, %v106
  %108 = vadd.xlane.f32.xlu0 %v107
  %v109 = vpop.xlane.xlu0 %108
  %v110 = vsel %vm85, %v71, 0.0
  %v111 = vadd.f32 %v70, %v110
  %112 = vadd.xlane.f32.xlu0 %v111
  %v113 = vpop.xlane.xlu0 %112
  %v114 = vsel %vm85, %v73, 0.0
  %v115 = vadd.f32 %v72, %v114
  %116 = vadd.xlane.f32.xlu0 %v115
  %v117 = vpop.xlane.xlu0 %116
  %v118 = vsel %vm85, %v75, 0.0
  %v119 = vadd.f32 %v74, %v118
  %120 = vadd.xlane.f32.xlu0 %v119
  %v121 = vpop.xlane.xlu0 %120
  %v122 = vmul.f32 %v109, 0.006666667
  %v123 = vmul.f32 %v113, 0.006666667
  %v124 = vmul.f32 %v117, 0.006666667
  %v125 = vmul.f32 %v121, 0.006666667
  %v126 = vmul.f32 %v102, %v102
  %v127 = vmul.f32 %v103, %v103
  %v128 = vmul.f32 %v104, %v104
  %v129 = vmul.f32 %v105, %v105
  %v130 = vadd.f32 %v126, %v127
  %v131 = vadd.f32 %v130, %v128
  %v132 = vadd.f32 %v131, %v129
  %v133 = vrot.slane %v132, 4
  %v134 = vadd.f32 %v132, %v133
  %v135 = vrot.slane %v134, 2
  %v136 = vadd.f32 %v134, %v135
  %v137 = vrot.slane %v136, 1
  %v138 = vadd.f32 %v136, %v137
  %v139 = vmax.f32 %v138, 1e-24
  %v140 = vrsqrt.pop %v139
  %v141 = vmul.f32 %v102, %v140
  %v142 = vmul.f32 %v103, %v140
  %v143 = vmul.f32 %v104, %v140
  %v144 = vmul.f32 %v105, %v140
  %v145 = vmul.f32 %v122, %v122
  %v146 = vmul.f32 %v123, %v123
  %v147 = vmul.f32 %v124, %v124
  %v148 = vmul.f32 %v125, %v125
  %v149 = vadd.f32 %v145, %v146
  %v150 = vadd.f32 %v149, %v147
  %v151 = vadd.f32 %v150, %v148
  %v152 = vrot.slane %v151, 4
  %v153 = vadd.f32 %v151, %v152
  %v154 = vrot.slane %v153, 2
  %v155 = vadd.f32 %v153, %v154
  %v156 = vrot.slane %v155, 1
  %v157 = vadd.f32 %v155, %v156
  %v158 = vmax.f32 %v157, 1e-24
  %v159 = vrsqrt.pop %v158
  %v160 = vmul.f32 %v122, %v159
  %v161 = vmul.f32 %v123, %v159
  %v162 = vmul.f32 %v124, %v159
  %v163 = vmul.f32 %v125, %v159
  %v164 = vmul.f32 %v141, %v160
  %v165 = vmul.f32 %v142, %v161
  %v166 = vmul.f32 %v143, %v162
  %v167 = vmul.f32 %v144, %v163
  %v168 = vadd.f32 %v164, %v165
  %v169 = vadd.f32 %v168, %v166
  %v170 = vadd.f32 %v169, %v167
  %v171 = vrot.slane %v170, 4
  %v172 = vadd.f32 %v170, %v171
  %v173 = vrot.slane %v172, 2
  %v174 = vadd.f32 %v172, %v173
  %v175 = vrot.slane %v174, 1
  %v176 = vadd.f32 %v174, %v175
  %v177 = vmul.f32 %v141, %v77
  %v178 = vmul.f32 %v141, %v78
  %v179 = vmul.f32 %v142, %v79
  %v180 = vmul.f32 %v142, %v80
  %v181 = vmul.f32 %v143, %v81
  %v182 = vmul.f32 %v143, %v82
  %v183 = vmul.f32 %v144, %v83
  %v184 = vmul.f32 %v144, %v84
  %v185 = vadd.f32 %v177, %v179
  %v186 = vadd.f32 %v185, %v181
  %v187 = vadd.f32 %v186, %v183
  %v188 = vrot.slane %v187, 4
  %v189 = vadd.f32 %v187, %v188
  %v190 = vrot.slane %v189, 2
  %v191 = vadd.f32 %v189, %v190
  %v192 = vrot.slane %v191, 1
  %v193 = vadd.f32 %v191, %v192
  %v194 = vsel %vm85, %v178, 0.0
  %v195 = vsel %vm85, %v180, 0.0
  %v196 = vadd.f32 %v194, %v195
  %v197 = vsel %vm85, %v182, 0.0
  %v198 = vadd.f32 %v196, %v197
  %v199 = vsel %vm85, %v184, 0.0
  %v200 = vadd.f32 %v198, %v199
  %v201 = vrot.slane %v200, 4
  %v202 = vadd.f32 %v200, %v201
  %v203 = vrot.slane %v202, 2
  %v204 = vadd.f32 %v202, %v203
  %v205 = vrot.slane %v204, 1
  %v206 = vadd.f32 %v204, %v205
  %v207 = vmul.f32 %v77, %v77
  %v208 = vmul.f32 %v78, %v78
  %v209 = vmul.f32 %v79, %v79
  %v210 = vmul.f32 %v80, %v80
  %v211 = vmul.f32 %v81, %v81
  %v212 = vmul.f32 %v82, %v82
  %v213 = vmul.f32 %v83, %v83
  %v214 = vmul.f32 %v84, %v84
  %v215 = vadd.f32 %v207, %v209
  %v216 = vadd.f32 %v215, %v211
  %v217 = vadd.f32 %v216, %v213
  %v218 = vrot.slane %v217, 4
  %v219 = vadd.f32 %v217, %v218
  %v220 = vrot.slane %v219, 2
  %v221 = vadd.f32 %v219, %v220
  %v222 = vrot.slane %v221, 1
  %v223 = vadd.f32 %v221, %v222
  %v224 = vsel %vm85, %v208, 0.0
  %v225 = vsel %vm85, %v210, 0.0
  %v226 = vadd.f32 %v224, %v225
  %v227 = vsel %vm85, %v212, 0.0
  %v228 = vadd.f32 %v226, %v227
  %v229 = vsel %vm85, %v214, 0.0
  %v230 = vadd.f32 %v228, %v229
  %v231 = vrot.slane %v230, 4
  %v232 = vadd.f32 %v230, %v231
  %v233 = vrot.slane %v232, 2
  %v234 = vadd.f32 %v232, %v233
  %v235 = vrot.slane %v234, 1
  %v236 = vadd.f32 %v234, %v235
  %v237 = vmax.f32 %v223, 1e-24
  %v238 = vmax.f32 %v236, 1e-24
  %v239 = vrsqrt.pop %v237
  %v240 = vrsqrt.pop %v238
  %v241 = vmul.f32 %v14, %v193
  %v242 = vmul.f32 %v15, %v206
  %v243 = vmul.f32 %v241, %v239
  %v244 = vmul.f32 %v242, %v240
  %v245 = vmul.f32 %v176, 14.285714
  %v246 = vmul.f32 %v243, 14.285714
  %v247 = vmul.f32 %v244, 14.285714
  %vm248 = vcmask 1044484
  %v249 = vsel %vm248, %v246, -inf
  %vm250 = vcmask 176132
  %v251 = vsel %vm250, %v247, -inf
  %v252 = vmax.f32 %v249, %v251
  %253 = vmax.xlane.f32.xlu0 %v252
  %v254 = vpop.xlane.xlu0 %253
  %v255 = vmax.f32 %v245, %v254
  %v256 = vsub.f32 %v245, %v255
  %v257 = vmul.f32 %v256, 1.442695
  %v258 = vpow.pop %v257
  %v259 = vsub.f32 %v246, %v255
  %v260 = vsub.f32 %v247, %v255
  %v261 = vmul.f32 %v259, 1.442695
  %v262 = vpow.pop %v261
  %v263 = vmul.f32 %v260, 1.442695
  %v264 = vpow.pop %v263
  %v265 = vsel %vm248, %v262, 0.0
  %v266 = vsel %vm250, %v264, 0.0
  %v267 = vadd.f32 %v265, %v266
  %268 = vadd.xlane.f32.xlu0 %v267
  %v269 = vpop.xlane.xlu0 %268
  %v270 = vadd.f32 %v258, %v269
  %v271 = vlog2.pop %v270
  %v272 = vmul.f32 %v271, 0.6931472
  %v273 = vadd.f32 %v255, %v272
  %v274 = vsub.f32 %v273, %v245
  %v275 = vadd.f32 %v274, 0.0
  %s276 = scalar_lea.vmem %s0, 64
  %v277 = vld [vmem:[%s276] sm:$0xff]
  %v278 = vld [vmem:[%s276 + $0x8] sm:$0xff]
  %v279 = vld [vmem:[%s276 + $0x10] sm:$0xff]
  %v280 = vld [vmem:[%s276 + $0x18] sm:$0xff]
  %v281 = vld [vmem:[%s276 + $0x20] sm:$0xff]
  %v282 = vld [vmem:[%s276 + $0x28] sm:$0xff]
  %v283 = vld [vmem:[%s276 + $0x30] sm:$0xff]
  %v284 = vld [vmem:[%s276 + $0x38] sm:$0xff]
  %s285 = scalar_lea.vmem %s0, 192
  %v286 = vld [vmem:[%s285] sm:$0xff]
  %v287 = vld [vmem:[%s285 + $0x8] sm:$0xff]
  %v288 = vld [vmem:[%s285 + $0x10] sm:$0xff]
  %v289 = vld [vmem:[%s285 + $0x18] sm:$0xff]
  %v290 = vld [vmem:[%s285 + $0x20] sm:$0xff]
  %v291 = vld [vmem:[%s285 + $0x28] sm:$0xff]
  %v292 = vld [vmem:[%s285 + $0x30] sm:$0xff]
  %v293 = vld [vmem:[%s285 + $0x38] sm:$0xff]
  %s294 = scalar_lea.vmem %s0, 448
  %v295 = vld [vmem:[%s294] sm:$0xff]
  %v296 = vld [vmem:[%s294 + $0x8] sm:$0xff]
  %v297 = vld [vmem:[%s294 + $0x10] sm:$0xff]
  %v298 = vld [vmem:[%s294 + $0x18] sm:$0xff]
  %v299 = vld [vmem:[%s294 + $0x20] sm:$0xff]
  %v300 = vld [vmem:[%s294 + $0x28] sm:$0xff]
  %v301 = vld [vmem:[%s294 + $0x30] sm:$0xff]
  %v302 = vld [vmem:[%s294 + $0x38] sm:$0xff]
  %v303 = vsel %vm85, %v278, 0.0
  %v304 = vadd.f32 %v277, %v303
  %305 = vadd.xlane.f32.xlu0 %v304
  %v306 = vpop.xlane.xlu0 %305
  %v307 = vsel %vm85, %v280, 0.0
  %v308 = vadd.f32 %v279, %v307
  %309 = vadd.xlane.f32.xlu0 %v308
  %v310 = vpop.xlane.xlu0 %309
  %v311 = vsel %vm85, %v282, 0.0
  %v312 = vadd.f32 %v281, %v311
  %313 = vadd.xlane.f32.xlu0 %v312
  %v314 = vpop.xlane.xlu0 %313
  %v315 = vsel %vm85, %v284, 0.0
  %v316 = vadd.f32 %v283, %v315
  %317 = vadd.xlane.f32.xlu0 %v316
  %v318 = vpop.xlane.xlu0 %317
  %v319 = vmul.f32 %v306, 0.006666667
  %v320 = vmul.f32 %v310, 0.006666667
  %v321 = vmul.f32 %v314, 0.006666667
  %v322 = vmul.f32 %v318, 0.006666667
  %v323 = vsel %vm85, %v287, 0.0
  %v324 = vadd.f32 %v286, %v323
  %325 = vadd.xlane.f32.xlu0 %v324
  %v326 = vpop.xlane.xlu0 %325
  %v327 = vsel %vm85, %v289, 0.0
  %v328 = vadd.f32 %v288, %v327
  %329 = vadd.xlane.f32.xlu0 %v328
  %v330 = vpop.xlane.xlu0 %329
  %v331 = vsel %vm85, %v291, 0.0
  %v332 = vadd.f32 %v290, %v331
  %333 = vadd.xlane.f32.xlu0 %v332
  %v334 = vpop.xlane.xlu0 %333
  %v335 = vsel %vm85, %v293, 0.0
  %v336 = vadd.f32 %v292, %v335
  %337 = vadd.xlane.f32.xlu0 %v336
  %v338 = vpop.xlane.xlu0 %337
  %v339 = vmul.f32 %v326, 0.006666667
  %v340 = vmul.f32 %v330, 0.006666667
  %v341 = vmul.f32 %v334, 0.006666667
  %v342 = vmul.f32 %v338, 0.006666667
  %v343 = vmul.f32 %v319, %v319
  %v344 = vmul.f32 %v320, %v320
  %v345 = vmul.f32 %v321, %v321
  %v346 = vmul.f32 %v322, %v322
  %v347 = vadd.f32 %v343, %v344
  %v348 = vadd.f32 %v347, %v345
  %v349 = vadd.f32 %v348, %v346
  %v350 = vrot.slane %v349, 4
  %v351 = vadd.f32 %v349, %v350
  %v352 = vrot.slane %v351, 2
  %v353 = vadd.f32 %v351, %v352
  %v354 = vrot.slane %v353, 1
  %v355 = vadd.f32 %v353, %v354
  %v356 = vmax.f32 %v355, 1e-24
  %v357 = vrsqrt.pop %v356
  %v358 = vmul.f32 %v319, %v357
  %v359 = vmul.f32 %v320, %v357
  %v360 = vmul.f32 %v321, %v357
  %v361 = vmul.f32 %v322, %v357
  %v362 = vmul.f32 %v339, %v339
  %v363 = vmul.f32 %v340, %v340
  %v364 = vmul.f32 %v341, %v341
  %v365 = vmul.f32 %v342, %v342
  %v366 = vadd.f32 %v362, %v363
  %v367 = vadd.f32 %v366, %v364
  %v368 = vadd.f32 %v367, %v365
  %v369 = vrot.slane %v368, 4
  %v370 = vadd.f32 %v368, %v369
  %v371 = vrot.slane %v370, 2
  %v372 = vadd.f32 %v370, %v371
  %v373 = vrot.slane %v372, 1
  %v374 = vadd.f32 %v372, %v373
  %v375 = vmax.f32 %v374, 1e-24
  %v376 = vrsqrt.pop %v375
  %v377 = vmul.f32 %v339, %v376
  %v378 = vmul.f32 %v340, %v376
  %v379 = vmul.f32 %v341, %v376
  %v380 = vmul.f32 %v342, %v376
  %v381 = vmul.f32 %v358, %v377
  %v382 = vmul.f32 %v359, %v378
  %v383 = vmul.f32 %v360, %v379
  %v384 = vmul.f32 %v361, %v380
  %v385 = vadd.f32 %v381, %v382
  %v386 = vadd.f32 %v385, %v383
  %v387 = vadd.f32 %v386, %v384
  %v388 = vrot.slane %v387, 4
  %v389 = vadd.f32 %v387, %v388
  %v390 = vrot.slane %v389, 2
  %v391 = vadd.f32 %v389, %v390
  %v392 = vrot.slane %v391, 1
  %v393 = vadd.f32 %v391, %v392
  %v394 = vmul.f32 %v358, %v295
  %v395 = vmul.f32 %v358, %v296
  %v396 = vmul.f32 %v359, %v297
  %v397 = vmul.f32 %v359, %v298
  %v398 = vmul.f32 %v360, %v299
  %v399 = vmul.f32 %v360, %v300
  %v400 = vmul.f32 %v361, %v301
  %v401 = vmul.f32 %v361, %v302
  %v402 = vadd.f32 %v394, %v396
  %v403 = vadd.f32 %v402, %v398
  %v404 = vadd.f32 %v403, %v400
  %v405 = vrot.slane %v404, 4
  %v406 = vadd.f32 %v404, %v405
  %v407 = vrot.slane %v406, 2
  %v408 = vadd.f32 %v406, %v407
  %v409 = vrot.slane %v408, 1
  %v410 = vadd.f32 %v408, %v409
  %v411 = vsel %vm85, %v395, 0.0
  %v412 = vsel %vm85, %v397, 0.0
  %v413 = vadd.f32 %v411, %v412
  %v414 = vsel %vm85, %v399, 0.0
  %v415 = vadd.f32 %v413, %v414
  %v416 = vsel %vm85, %v401, 0.0
  %v417 = vadd.f32 %v415, %v416
  %v418 = vrot.slane %v417, 4
  %v419 = vadd.f32 %v417, %v418
  %v420 = vrot.slane %v419, 2
  %v421 = vadd.f32 %v419, %v420
  %v422 = vrot.slane %v421, 1
  %v423 = vadd.f32 %v421, %v422
  %v424 = vmul.f32 %v295, %v295
  %v425 = vmul.f32 %v296, %v296
  %v426 = vmul.f32 %v297, %v297
  %v427 = vmul.f32 %v298, %v298
  %v428 = vmul.f32 %v299, %v299
  %v429 = vmul.f32 %v300, %v300
  %v430 = vmul.f32 %v301, %v301
  %v431 = vmul.f32 %v302, %v302
  %v432 = vadd.f32 %v424, %v426
  %v433 = vadd.f32 %v432, %v428
  %v434 = vadd.f32 %v433, %v430
  %v435 = vrot.slane %v434, 4
  %v436 = vadd.f32 %v434, %v435
  %v437 = vrot.slane %v436, 2
  %v438 = vadd.f32 %v436, %v437
  %v439 = vrot.slane %v438, 1
  %v440 = vadd.f32 %v438, %v439
  %v441 = vsel %vm85, %v425, 0.0
  %v442 = vsel %vm85, %v427, 0.0
  %v443 = vadd.f32 %v441, %v442
  %v444 = vsel %vm85, %v429, 0.0
  %v445 = vadd.f32 %v443, %v444
  %v446 = vsel %vm85, %v431, 0.0
  %v447 = vadd.f32 %v445, %v446
  %v448 = vrot.slane %v447, 4
  %v449 = vadd.f32 %v447, %v448
  %v450 = vrot.slane %v449, 2
  %v451 = vadd.f32 %v449, %v450
  %v452 = vrot.slane %v451, 1
  %v453 = vadd.f32 %v451, %v452
  %v454 = vmax.f32 %v440, 1e-24
  %v455 = vmax.f32 %v453, 1e-24
  %v456 = vrsqrt.pop %v454
  %v457 = vrsqrt.pop %v455
  %v458 = vmul.f32 %v14, %v410
  %v459 = vmul.f32 %v15, %v423
  %v460 = vmul.f32 %v458, %v456
  %v461 = vmul.f32 %v459, %v457
  %v462 = vmul.f32 %v393, 14.285714
  %v463 = vmul.f32 %v460, 14.285714
  %v464 = vmul.f32 %v461, 14.285714
  %vm465 = vcmask 1045509
  %v466 = vsel %vm465, %v463, -inf
  %vm467 = vcmask 177157
  %v468 = vsel %vm467, %v464, -inf
  %v469 = vmax.f32 %v466, %v468
  %470 = vmax.xlane.f32.xlu0 %v469
  %v471 = vpop.xlane.xlu0 %470
  %v472 = vmax.f32 %v462, %v471
  %v473 = vsub.f32 %v462, %v472
  %v474 = vmul.f32 %v473, 1.442695
  %v475 = vpow.pop %v474
  %v476 = vsub.f32 %v463, %v472
  %v477 = vsub.f32 %v464, %v472
  %v478 = vmul.f32 %v476, 1.442695
  %v479 = vpow.pop %v478
  %v480 = vmul.f32 %v477, 1.442695
  %v481 = vpow.pop %v480
  %v482 = vsel %vm465, %v479, 0.0
  %v483 = vsel %vm467, %v481, 0.0
  %v484 = vadd.f32 %v482, %v483
  %485 = vadd.xlane.f32.xlu0 %v484
  %v486 = vpop.xlane.xlu0 %485
  %v487 = vadd.f32 %v475, %v486
  %v488 = vlog2.pop %v487
  %v489 = vmul.f32 %v488, 0.6931472
  %v490 = vadd.f32 %v472, %v489
  %v491 = vsub.f32 %v490, %v462
  %v493 = vrot.slane %v491, 1
  %v495 = vadd.f32 %v275, %v493
  %v496 = vmul.f32 %v495, 0.5
  %s497 = scalar_lea.vmem %s0, 256
  %v498 = vld [vmem:[%s497] sm:$0xff]
  %v499 = vld [vmem:[%s497 + $0x8] sm:$0xff]
  %v500 = vld [vmem:[%s497 + $0x10] sm:$0xff]
  %v501 = vld [vmem:[%s497 + $0x18] sm:$0xff]
  %v502 = vld [vmem:[%s497 + $0x20] sm:$0xff]
  %v503 = vld [vmem:[%s497 + $0x28] sm:$0xff]
  %v504 = vld [vmem:[%s497 + $0x30] sm:$0xff]
  %v505 = vld [vmem:[%s497 + $0x38] sm:$0xff]
  %v506 = vsel %vm85, %v499, 0.0
  %v507 = vadd.f32 %v498, %v506
  %508 = vadd.xlane.f32.xlu0 %v507
  %v509 = vpop.xlane.xlu0 %508
  %v510 = vsel %vm85, %v501, 0.0
  %v511 = vadd.f32 %v500, %v510
  %512 = vadd.xlane.f32.xlu0 %v511
  %v513 = vpop.xlane.xlu0 %512
  %v514 = vsel %vm85, %v503, 0.0
  %v515 = vadd.f32 %v502, %v514
  %516 = vadd.xlane.f32.xlu0 %v515
  %v517 = vpop.xlane.xlu0 %516
  %v518 = vsel %vm85, %v505, 0.0
  %v519 = vadd.f32 %v504, %v518
  %520 = vadd.xlane.f32.xlu0 %v519
  %v521 = vpop.xlane.xlu0 %520
  %v522 = vmul.f32 %v509, 0.006666667
  %v523 = vmul.f32 %v513, 0.006666667
  %v524 = vmul.f32 %v517, 0.006666667
  %v525 = vmul.f32 %v521, 0.006666667
  %v526 = vsel %vm85, %v78, 0.0
  %v527 = vadd.f32 %v77, %v526
  %528 = vadd.xlane.f32.xlu0 %v527
  %v529 = vpop.xlane.xlu0 %528
  %v530 = vsel %vm85, %v80, 0.0
  %v531 = vadd.f32 %v79, %v530
  %532 = vadd.xlane.f32.xlu0 %v531
  %v533 = vpop.xlane.xlu0 %532
  %v534 = vsel %vm85, %v82, 0.0
  %v535 = vadd.f32 %v81, %v534
  %536 = vadd.xlane.f32.xlu0 %v535
  %v537 = vpop.xlane.xlu0 %536
  %v538 = vsel %vm85, %v84, 0.0
  %v539 = vadd.f32 %v83, %v538
  %540 = vadd.xlane.f32.xlu0 %v539
  %v541 = vpop.xlane.xlu0 %540
  %v542 = vmul.f32 %v529, 0.006666667
  %v543 = vmul.f32 %v533, 0.006666667
  %v544 = vmul.f32 %v537, 0.006666667
  %v545 = vmul.f32 %v541, 0.006666667
  %v546 = vmul.f32 %v522, %v522
  %v547 = vmul.f32 %v523, %v523
  %v548 = vmul.f32 %v524, %v524
  %v549 = vmul.f32 %v525, %v525
  %v550 = vadd.f32 %v546, %v547
  %v551 = vadd.f32 %v550, %v548
  %v552 = vadd.f32 %v551, %v549
  %v553 = vrot.slane %v552, 4
  %v554 = vadd.f32 %v552, %v553
  %v555 = vrot.slane %v554, 2
  %v556 = vadd.f32 %v554, %v555
  %v557 = vrot.slane %v556, 1
  %v558 = vadd.f32 %v556, %v557
  %v559 = vmax.f32 %v558, 1e-24
  %v560 = vrsqrt.pop %v559
  %v561 = vmul.f32 %v522, %v560
  %v562 = vmul.f32 %v523, %v560
  %v563 = vmul.f32 %v524, %v560
  %v564 = vmul.f32 %v525, %v560
  %v565 = vmul.f32 %v542, %v542
  %v566 = vmul.f32 %v543, %v543
  %v567 = vmul.f32 %v544, %v544
  %v568 = vmul.f32 %v545, %v545
  %v569 = vadd.f32 %v565, %v566
  %v570 = vadd.f32 %v569, %v567
  %v571 = vadd.f32 %v570, %v568
  %v572 = vrot.slane %v571, 4
  %v573 = vadd.f32 %v571, %v572
  %v574 = vrot.slane %v573, 2
  %v575 = vadd.f32 %v573, %v574
  %v576 = vrot.slane %v575, 1
  %v577 = vadd.f32 %v575, %v576
  %v578 = vmax.f32 %v577, 1e-24
  %v579 = vrsqrt.pop %v578
  %v580 = vmul.f32 %v542, %v579
  %v581 = vmul.f32 %v543, %v579
  %v582 = vmul.f32 %v544, %v579
  %v583 = vmul.f32 %v545, %v579
  %v584 = vmul.f32 %v561, %v580
  %v585 = vmul.f32 %v562, %v581
  %v586 = vmul.f32 %v563, %v582
  %v587 = vmul.f32 %v564, %v583
  %v588 = vadd.f32 %v584, %v585
  %v589 = vadd.f32 %v588, %v586
  %v590 = vadd.f32 %v589, %v587
  %v591 = vrot.slane %v590, 4
  %v592 = vadd.f32 %v590, %v591
  %v593 = vrot.slane %v592, 2
  %v594 = vadd.f32 %v592, %v593
  %v595 = vrot.slane %v594, 1
  %v596 = vadd.f32 %v594, %v595
  %v597 = vmul.f32 %v561, %v68
  %v598 = vmul.f32 %v561, %v69
  %v599 = vmul.f32 %v562, %v70
  %v600 = vmul.f32 %v562, %v71
  %v601 = vmul.f32 %v563, %v72
  %v602 = vmul.f32 %v563, %v73
  %v603 = vmul.f32 %v564, %v74
  %v604 = vmul.f32 %v564, %v75
  %v605 = vadd.f32 %v597, %v599
  %v606 = vadd.f32 %v605, %v601
  %v607 = vadd.f32 %v606, %v603
  %v608 = vrot.slane %v607, 4
  %v609 = vadd.f32 %v607, %v608
  %v610 = vrot.slane %v609, 2
  %v611 = vadd.f32 %v609, %v610
  %v612 = vrot.slane %v611, 1
  %v613 = vadd.f32 %v611, %v612
  %v614 = vsel %vm85, %v598, 0.0
  %v615 = vsel %vm85, %v600, 0.0
  %v616 = vadd.f32 %v614, %v615
  %v617 = vsel %vm85, %v602, 0.0
  %v618 = vadd.f32 %v616, %v617
  %v619 = vsel %vm85, %v604, 0.0
  %v620 = vadd.f32 %v618, %v619
  %v621 = vrot.slane %v620, 4
  %v622 = vadd.f32 %v620, %v621
  %v623 = vrot.slane %v622, 2
  %v624 = vadd.f32 %v622, %v623
  %v625 = vrot.slane %v624, 1
  %v626 = vadd.f32 %v624, %v625
  %v627 = vmul.f32 %v68, %v68
  %v628 = vmul.f32 %v69, %v69
  %v629 = vmul.f32 %v70, %v70
  %v630 = vmul.f32 %v71, %v71
  %v631 = vmul.f32 %v72, %v72
  %v632 = vmul.f32 %v73, %v73
  %v633 = vmul.f32 %v74, %v74
  %v634 = vmul.f32 %v75, %v75
  %v635 = vadd.f32 %v627, %v629
  %v636 = vadd.f32 %v635, %v631
  %v637 = vadd.f32 %v636, %v633
  %v638 = vrot.slane %v637, 4
  %v639 = vadd.f32 %v637, %v638
  %v640 = vrot.slane %v639, 2
  %v641 = vadd.f32 %v639, %v640
  %v642 = vrot.slane %v641, 1
  %v643 = vadd.f32 %v641, %v642
  %v644 = vsel %vm85, %v628, 0.0
  %v645 = vsel %vm85, %v630, 0.0
  %v646 = vadd.f32 %v644, %v645
  %v647 = vsel %vm85, %v632, 0.0
  %v648 = vadd.f32 %v646, %v647
  %v649 = vsel %vm85, %v634, 0.0
  %v650 = vadd.f32 %v648, %v649
  %v651 = vrot.slane %v650, 4
  %v652 = vadd.f32 %v650, %v651
  %v653 = vrot.slane %v652, 2
  %v654 = vadd.f32 %v652, %v653
  %v655 = vrot.slane %v654, 1
  %v656 = vadd.f32 %v654, %v655
  %v657 = vmax.f32 %v643, 1e-24
  %v658 = vmax.f32 %v656, 1e-24
  %v659 = vrsqrt.pop %v657
  %v660 = vrsqrt.pop %v658
  %v661 = vmul.f32 %v14, %v613
  %v662 = vmul.f32 %v15, %v626
  %v663 = vmul.f32 %v661, %v659
  %v664 = vmul.f32 %v662, %v660
  %v665 = vmul.f32 %v596, 14.285714
  %v666 = vmul.f32 %v663, 14.285714
  %v667 = vmul.f32 %v664, 14.285714
  %vm668 = vcmask 1046534
  %v669 = vsel %vm668, %v666, -inf
  %vm670 = vcmask 178182
  %v671 = vsel %vm670, %v667, -inf
  %v672 = vmax.f32 %v669, %v671
  %673 = vmax.xlane.f32.xlu0 %v672
  %v674 = vpop.xlane.xlu0 %673
  %v675 = vmax.f32 %v665, %v674
  %v676 = vsub.f32 %v665, %v675
  %v677 = vmul.f32 %v676, 1.442695
  %v678 = vpow.pop %v677
  %v679 = vsub.f32 %v666, %v675
  %v680 = vsub.f32 %v667, %v675
  %v681 = vmul.f32 %v679, 1.442695
  %v682 = vpow.pop %v681
  %v683 = vmul.f32 %v680, 1.442695
  %v684 = vpow.pop %v683
  %v685 = vsel %vm668, %v682, 0.0
  %v686 = vsel %vm670, %v684, 0.0
  %v687 = vadd.f32 %v685, %v686
  %688 = vadd.xlane.f32.xlu0 %v687
  %v689 = vpop.xlane.xlu0 %688
  %v690 = vadd.f32 %v678, %v689
  %v691 = vlog2.pop %v690
  %v692 = vmul.f32 %v691, 0.6931472
  %v693 = vadd.f32 %v675, %v692
  %v694 = vsub.f32 %v693, %v665
  %v695 = vadd.f32 %v694, 0.0
  %s696 = scalar_lea.vmem %s0, 320
  %v697 = vld [vmem:[%s696] sm:$0xff]
  %v698 = vld [vmem:[%s696 + $0x8] sm:$0xff]
  %v699 = vld [vmem:[%s696 + $0x10] sm:$0xff]
  %v700 = vld [vmem:[%s696 + $0x18] sm:$0xff]
  %v701 = vld [vmem:[%s696 + $0x20] sm:$0xff]
  %v702 = vld [vmem:[%s696 + $0x28] sm:$0xff]
  %v703 = vld [vmem:[%s696 + $0x30] sm:$0xff]
  %v704 = vld [vmem:[%s696 + $0x38] sm:$0xff]
  %v705 = vsel %vm85, %v698, 0.0
  %v706 = vadd.f32 %v697, %v705
  %707 = vadd.xlane.f32.xlu0 %v706
  %v708 = vpop.xlane.xlu0 %707
  %v709 = vsel %vm85, %v700, 0.0
  %v710 = vadd.f32 %v699, %v709
  %711 = vadd.xlane.f32.xlu0 %v710
  %v712 = vpop.xlane.xlu0 %711
  %v713 = vsel %vm85, %v702, 0.0
  %v714 = vadd.f32 %v701, %v713
  %715 = vadd.xlane.f32.xlu0 %v714
  %v716 = vpop.xlane.xlu0 %715
  %v717 = vsel %vm85, %v704, 0.0
  %v718 = vadd.f32 %v703, %v717
  %719 = vadd.xlane.f32.xlu0 %v718
  %v720 = vpop.xlane.xlu0 %719
  %v721 = vmul.f32 %v708, 0.006666667
  %v722 = vmul.f32 %v712, 0.006666667
  %v723 = vmul.f32 %v716, 0.006666667
  %v724 = vmul.f32 %v720, 0.006666667
  %v725 = vsel %vm85, %v296, 0.0
  %v726 = vadd.f32 %v295, %v725
  %727 = vadd.xlane.f32.xlu0 %v726
  %v728 = vpop.xlane.xlu0 %727
  %v729 = vsel %vm85, %v298, 0.0
  %v730 = vadd.f32 %v297, %v729
  %731 = vadd.xlane.f32.xlu0 %v730
  %v732 = vpop.xlane.xlu0 %731
  %v733 = vsel %vm85, %v300, 0.0
  %v734 = vadd.f32 %v299, %v733
  %735 = vadd.xlane.f32.xlu0 %v734
  %v736 = vpop.xlane.xlu0 %735
  %v737 = vsel %vm85, %v302, 0.0
  %v738 = vadd.f32 %v301, %v737
  %739 = vadd.xlane.f32.xlu0 %v738
  %v740 = vpop.xlane.xlu0 %739
  %v741 = vmul.f32 %v728, 0.006666667
  %v742 = vmul.f32 %v732, 0.006666667
  %v743 = vmul.f32 %v736, 0.006666667
  %v744 = vmul.f32 %v740, 0.006666667
  %v745 = vmul.f32 %v721, %v721
  %v746 = vmul.f32 %v722, %v722
  %v747 = vmul.f32 %v723, %v723
  %v748 = vmul.f32 %v724, %v724
  %v749 = vadd.f32 %v745, %v746
  %v750 = vadd.f32 %v749, %v747
  %v751 = vadd.f32 %v750, %v748
  %v752 = vrot.slane %v751, 4
  %v753 = vadd.f32 %v751, %v752
  %v754 = vrot.slane %v753, 2
  %v755 = vadd.f32 %v753, %v754
  %v756 = vrot.slane %v755, 1
  %v757 = vadd.f32 %v755, %v756
  %v758 = vmax.f32 %v757, 1e-24
  %v759 = vrsqrt.pop %v758
  %v760 = vmul.f32 %v721, %v759
  %v761 = vmul.f32 %v722, %v759
  %v762 = vmul.f32 %v723, %v759
  %v763 = vmul.f32 %v724, %v759
  %v764 = vmul.f32 %v741, %v741
  %v765 = vmul.f32 %v742, %v742
  %v766 = vmul.f32 %v743, %v743
  %v767 = vmul.f32 %v744, %v744
  %v768 = vadd.f32 %v764, %v765
  %v769 = vadd.f32 %v768, %v766
  %v770 = vadd.f32 %v769, %v767
  %v771 = vrot.slane %v770, 4
  %v772 = vadd.f32 %v770, %v771
  %v773 = vrot.slane %v772, 2
  %v774 = vadd.f32 %v772, %v773
  %v775 = vrot.slane %v774, 1
  %v776 = vadd.f32 %v774, %v775
  %v777 = vmax.f32 %v776, 1e-24
  %v778 = vrsqrt.pop %v777
  %v779 = vmul.f32 %v741, %v778
  %v780 = vmul.f32 %v742, %v778
  %v781 = vmul.f32 %v743, %v778
  %v782 = vmul.f32 %v744, %v778
  %v783 = vmul.f32 %v760, %v779
  %v784 = vmul.f32 %v761, %v780
  %v785 = vmul.f32 %v762, %v781
  %v786 = vmul.f32 %v763, %v782
  %v787 = vadd.f32 %v783, %v784
  %v788 = vadd.f32 %v787, %v785
  %v789 = vadd.f32 %v788, %v786
  %v790 = vrot.slane %v789, 4
  %v791 = vadd.f32 %v789, %v790
  %v792 = vrot.slane %v791, 2
  %v793 = vadd.f32 %v791, %v792
  %v794 = vrot.slane %v793, 1
  %v795 = vadd.f32 %v793, %v794
  %v796 = vmul.f32 %v760, %v286
  %v797 = vmul.f32 %v760, %v287
  %v798 = vmul.f32 %v761, %v288
  %v799 = vmul.f32 %v761, %v289
  %v800 = vmul.f32 %v762, %v290
  %v801 = vmul.f32 %v762, %v291
  %v802 = vmul.f32 %v763, %v292
  %v803 = vmul.f32 %v763, %v293
  %v804 = vadd.f32 %v796, %v798
  %v805 = vadd.f32 %v804, %v800
  %v806 = vadd.f32 %v805, %v802
  %v807 = vrot.slane %v806, 4
  %v808 = vadd.f32 %v806, %v807
  %v809 = vrot.slane %v808, 2
  %v810 = vadd.f32 %v808, %v809
  %v811 = vrot.slane %v810, 1
  %v812 = vadd.f32 %v810, %v811
  %v813 = vsel %vm85, %v797, 0.0
  %v814 = vsel %vm85, %v799, 0.0
  %v815 = vadd.f32 %v813, %v814
  %v816 = vsel %vm85, %v801, 0.0
  %v817 = vadd.f32 %v815, %v816
  %v818 = vsel %vm85, %v803, 0.0
  %v819 = vadd.f32 %v817, %v818
  %v820 = vrot.slane %v819, 4
  %v821 = vadd.f32 %v819, %v820
  %v822 = vrot.slane %v821, 2
  %v823 = vadd.f32 %v821, %v822
  %v824 = vrot.slane %v823, 1
  %v825 = vadd.f32 %v823, %v824
  %v826 = vmul.f32 %v286, %v286
  %v827 = vmul.f32 %v287, %v287
  %v828 = vmul.f32 %v288, %v288
  %v829 = vmul.f32 %v289, %v289
  %v830 = vmul.f32 %v290, %v290
  %v831 = vmul.f32 %v291, %v291
  %v832 = vmul.f32 %v292, %v292
  %v833 = vmul.f32 %v293, %v293
  %v834 = vadd.f32 %v826, %v828
  %v835 = vadd.f32 %v834, %v830
  %v836 = vadd.f32 %v835, %v832
  %v837 = vrot.slane %v836, 4
  %v838 = vadd.f32 %v836, %v837
  %v839 = vrot.slane %v838, 2
  %v840 = vadd.f32 %v838, %v839
  %v841 = vrot.slane %v840, 1
  %v842 = vadd.f32 %v840, %v841
  %v843 = vsel %vm85, %v827, 0.0
  %v844 = vsel %vm85, %v829, 0.0
  %v845 = vadd.f32 %v843, %v844
  %v846 = vsel %vm85, %v831, 0.0
  %v847 = vadd.f32 %v845, %v846
  %v848 = vsel %vm85, %v833, 0.0
  %v849 = vadd.f32 %v847, %v848
  %v850 = vrot.slane %v849, 4
  %v851 = vadd.f32 %v849, %v850
  %v852 = vrot.slane %v851, 2
  %v853 = vadd.f32 %v851, %v852
  %v854 = vrot.slane %v853, 1
  %v855 = vadd.f32 %v853, %v854
  %v856 = vmax.f32 %v842, 1e-24
  %v857 = vmax.f32 %v855, 1e-24
  %v858 = vrsqrt.pop %v856
  %v859 = vrsqrt.pop %v857
  %v860 = vmul.f32 %v14, %v812
  %v861 = vmul.f32 %v15, %v825
  %v862 = vmul.f32 %v860, %v858
  %v863 = vmul.f32 %v861, %v859
  %v864 = vmul.f32 %v795, 14.285714
  %v865 = vmul.f32 %v862, 14.285714
  %v866 = vmul.f32 %v863, 14.285714
  %vm867 = vcmask 1047559
  %v868 = vsel %vm867, %v865, -inf
  %vm869 = vcmask 179207
  %v870 = vsel %vm869, %v866, -inf
  %v871 = vmax.f32 %v868, %v870
  %872 = vmax.xlane.f32.xlu0 %v871
  %v873 = vpop.xlane.xlu0 %872
  %v874 = vmax.f32 %v864, %v873
  %v875 = vsub.f32 %v864, %v874
  %v876 = vmul.f32 %v875, 1.442695
  %v877 = vpow.pop %v876
  %v878 = vsub.f32 %v865, %v874
  %v879 = vsub.f32 %v866, %v874
  %v880 = vmul.f32 %v878, 1.442695
  %v881 = vpow.pop %v880
  %v882 = vmul.f32 %v879, 1.442695
  %v883 = vpow.pop %v882
  %v884 = vsel %vm867, %v881, 0.0
  %v885 = vsel %vm869, %v883, 0.0
  %v886 = vadd.f32 %v884, %v885
  %887 = vadd.xlane.f32.xlu0 %v886
  %v888 = vpop.xlane.xlu0 %887
  %v889 = vadd.f32 %v877, %v888
  %v890 = vlog2.pop %v889
  %v891 = vmul.f32 %v890, 0.6931472
  %v892 = vadd.f32 %v874, %v891
  %v893 = vsub.f32 %v892, %v864
  %v895 = vrot.slane %v893, 1
  %v897 = vadd.f32 %v695, %v895
  %v898 = vmul.f32 %v897, 0.5
  %v900 = vrot.slane %v898, 2
  %v902 = vadd.f32 %v496, %v900
  %v903 = vsub.f32 1.0, %v16
  %v904 = vmul.f32 %v903, %v903
  %vm905 = vcmask 1043456
  %v906 = vsel %vm905, %v904, 0.0
  %907 = vadd.xlane.f32.xlu0 %v906
  %v908 = vpop.xlane.xlu0 %907
  %v909 = vrot.slane %v908, 4
  %v910 = vadd.f32 %v908, %v909
  %v911 = vrot.slane %v910, 2
  %v912 = vadd.f32 %v910, %v911
  %v913 = vrot.slane %v912, 1
  %v914 = vadd.f32 %v912, %v913
  %s915 = vtos %v914
  %v916 = vstv %s915
  %v917 = vrcp.pop 512.0
  %v918 = vmul.f32 %v916, %v917
  %v919 = vmul.f32 %v16, %v16
  %v920 = vmul.f32 %v17, %v17
  %v923 = vrot.slane %v919, 4
  %v924 = vrot.slane %v920, 4
  %v925 = vsel %vm905, %v923, %v924
  %vm927 = vcmask 1045504
  %v928 = vsel %vm927, %v925, 0.0
  %929 = vadd.xlane.f32.xlu0 %v928
  %v930 = vpop.xlane.xlu0 %929
  %v931 = vrot.slane %v930, 4
  %v932 = vadd.f32 %v930, %v931
  %v933 = vrot.slane %v932, 2
  %v934 = vadd.f32 %v932, %v933
  %v935 = vrot.slane %v934, 1
  %v936 = vadd.f32 %v934, %v935
  %s937 = vtos %v936
  %v938 = vstv %s937
  %v939 = vrcp.pop 768.0
  %v940 = vmul.f32 %v938, %v939
  %v941 = vadd.f32 %v918, %v940
  %v942 = vld [vmem:[%s2] sm:$0xff]
  %v943 = vld [vmem:[%s2 + $0x8] sm:$0xff]
  %v944 = vld [vmem:[%s2 + $0x10] sm:$0xff]
  %v945 = vld [vmem:[%s2 + $0x18] sm:$0xff]
  %v946 = vld [vmem:[%s2 + $0x20] sm:$0xff]
  %v947 = vld [vmem:[%s2 + $0x28] sm:$0xff]
  %v948 = vld [vmem:[%s2 + $0x30] sm:$0x7]
  %v949 = vld [vmem:[%s2 + $0x38] sm:$0x7]
  %v950 = vld [vmem:[%s2 + $0x40] sm:$0x7]
  %v951 = vld [vmem:[%s2 + $0x48] sm:$0x7]
  %v952 = vld [vmem:[%s2 + $0x50] sm:$0x7]
  %v953 = vld [vmem:[%s2 + $0x58] sm:$0x7]
  %s954 = scalar_lea.vmem %s2, 192
  %v955 = vld [vmem:[%s954] sm:$0xff]
  %v956 = vld [vmem:[%s954 + $0x8] sm:$0xff]
  %v957 = vld [vmem:[%s954 + $0x10] sm:$0xff]
  %v958 = vld [vmem:[%s954 + $0x18] sm:$0xff]
  %v959 = vld [vmem:[%s954 + $0x20] sm:$0xff]
  %v960 = vld [vmem:[%s954 + $0x28] sm:$0xff]
  %v961 = vld [vmem:[%s954 + $0x30] sm:$0x7]
  %v962 = vld [vmem:[%s954 + $0x38] sm:$0x7]
  %v963 = vld [vmem:[%s954 + $0x40] sm:$0x7]
  %v964 = vld [vmem:[%s954 + $0x48] sm:$0x7]
  %v965 = vld [vmem:[%s954 + $0x50] sm:$0x7]
  %v966 = vld [vmem:[%s954 + $0x58] sm:$0x7]
  %v967 = vlaneseq
  %v968 = vshrl.u32 %v967, 7
  %v969 = vsub.s32 6, %v968
  %v970 = vrot.slane %v942, %v969
  %v971 = vlaneseq
  %v972 = vshrl.u32 %v971, 7
  %v973 = vsub.s32 6, %v972
  %v974 = vrot.slane %v943, %v973
  %v975 = vlaneseq
  %v976 = vshrl.u32 %v975, 7
  %v977 = vsub.s32 6, %v976
  %v978 = vrot.slane %v944, %v977
  %v979 = vlaneseq
  %v980 = vshrl.u32 %v979, 7
  %v981 = vsub.s32 6, %v980
  %v982 = vrot.slane %v945, %v981
  %v983 = vlaneseq
  %v984 = vshrl.u32 %v983, 7
  %v985 = vsub.s32 6, %v984
  %v986 = vrot.slane %v946, %v985
  %v987 = vlaneseq
  %v988 = vshrl.u32 %v987, 7
  %v989 = vsub.s32 6, %v988
  %v990 = vrot.slane %v947, %v989
  %v991 = vsub.f32 %v970, %v942
  %v992 = vsub.f32 %v974, %v943
  %v993 = vsub.f32 %v978, %v944
  %v994 = vsub.f32 %v982, %v945
  %v995 = vsub.f32 %v986, %v946
  %v996 = vsub.f32 %v990, %v947
  %v997 = vsub.f32 %v970, %v948
  %v998 = vsub.f32 %v974, %v949
  %v999 = vsub.f32 %v978, %v950
  %v1000 = vsub.f32 %v982, %v951
  %v1001 = vsub.f32 %v986, %v952
  %v1002 = vsub.f32 %v990, %v953
  %v1003 = vmul.f32 %v991, %v991
  %v1004 = vmul.f32 %v992, %v992
  %v1005 = vmul.f32 %v993, %v993
  %v1006 = vmul.f32 %v994, %v994
  %v1007 = vmul.f32 %v995, %v995
  %v1008 = vmul.f32 %v996, %v996
  %v1009 = vmul.f32 %v997, %v997
  %v1010 = vmul.f32 %v998, %v998
  %v1011 = vmul.f32 %v999, %v999
  %v1012 = vmul.f32 %v1000, %v1000
  %v1013 = vmul.f32 %v1001, %v1001
  %v1014 = vmul.f32 %v1002, %v1002
  %v1015 = vadd.f32 %v1003, 0.0
  %v1016 = vadd.f32 %v1004, 0.0
  %v1017 = vadd.f32 %v1005, 0.0
  %v1018 = vadd.f32 %v1006, 0.0
  %v1019 = vadd.f32 %v1007, 0.0
  %v1020 = vadd.f32 %v1008, 0.0
  %v1021 = vadd.f32 %v1009, 0.0
  %v1022 = vadd.f32 %v1010, 0.0
  %v1023 = vadd.f32 %v1011, 0.0
  %v1024 = vadd.f32 %v1012, 0.0
  %v1025 = vadd.f32 %v1013, 0.0
  %v1026 = vadd.f32 %v1014, 0.0
  %v1027 = vlaneseq
  %v1028 = vshrl.u32 %v1027, 7
  %v1029 = vsub.s32 6, %v1028
  %v1030 = vrot.slane %v955, %v1029
  %v1031 = vlaneseq
  %v1032 = vshrl.u32 %v1031, 7
  %v1033 = vsub.s32 6, %v1032
  %v1034 = vrot.slane %v956, %v1033
  %v1035 = vlaneseq
  %v1036 = vshrl.u32 %v1035, 7
  %v1037 = vsub.s32 6, %v1036
  %v1038 = vrot.slane %v957, %v1037
  %v1039 = vlaneseq
  %v1040 = vshrl.u32 %v1039, 7
  %v1041 = vsub.s32 6, %v1040
  %v1042 = vrot.slane %v958, %v1041
  %v1043 = vlaneseq
  %v1044 = vshrl.u32 %v1043, 7
  %v1045 = vsub.s32 6, %v1044
  %v1046 = vrot.slane %v959, %v1045
  %v1047 = vlaneseq
  %v1048 = vshrl.u32 %v1047, 7
  %v1049 = vsub.s32 6, %v1048
  %v1050 = vrot.slane %v960, %v1049
  %v1051 = vsub.f32 %v1030, %v955
  %v1052 = vsub.f32 %v1034, %v956
  %v1053 = vsub.f32 %v1038, %v957
  %v1054 = vsub.f32 %v1042, %v958
  %v1055 = vsub.f32 %v1046, %v959
  %v1056 = vsub.f32 %v1050, %v960
  %v1057 = vsub.f32 %v1030, %v961
  %v1058 = vsub.f32 %v1034, %v962
  %v1059 = vsub.f32 %v1038, %v963
  %v1060 = vsub.f32 %v1042, %v964
  %v1061 = vsub.f32 %v1046, %v965
  %v1062 = vsub.f32 %v1050, %v966
  %v1063 = vand.u32 2147483647, %v1051
  %v1064 = vand.u32 2147483647, %v1052
  %v1065 = vand.u32 2147483647, %v1053
  %v1066 = vand.u32 2147483647, %v1054
  %v1067 = vand.u32 2147483647, %v1055
  %v1068 = vand.u32 2147483647, %v1056
  %v1069 = vand.u32 2147483647, %v1057
  %v1070 = vand.u32 2147483647, %v1058
  %v1071 = vand.u32 2147483647, %v1059
  %v1072 = vand.u32 2147483647, %v1060
  %v1073 = vand.u32 2147483647, %v1061
  %v1074 = vand.u32 2147483647, %v1062
  %v1075 = vadd.f32 %v1063, 0.0
  %v1076 = vadd.f32 %v1064, 0.0
  %v1077 = vadd.f32 %v1065, 0.0
  %v1078 = vadd.f32 %v1066, 0.0
  %v1079 = vadd.f32 %v1067, 0.0
  %v1080 = vadd.f32 %v1068, 0.0
  %v1081 = vadd.f32 %v1069, 0.0
  %v1082 = vadd.f32 %v1070, 0.0
  %v1083 = vadd.f32 %v1071, 0.0
  %v1084 = vadd.f32 %v1072, 0.0
  %v1085 = vadd.f32 %v1073, 0.0
  %v1086 = vadd.f32 %v1074, 0.0
  %v1087 = vsub.f32 %v942, %v955
  %v1088 = vsub.f32 %v943, %v956
  %v1089 = vsub.f32 %v944, %v957
  %v1090 = vsub.f32 %v945, %v958
  %v1091 = vsub.f32 %v946, %v959
  %v1092 = vsub.f32 %v947, %v960
  %v1093 = vmul.f32 %v1087, %v1087
  %v1094 = vmul.f32 %v1088, %v1088
  %v1095 = vmul.f32 %v1089, %v1089
  %v1096 = vmul.f32 %v1090, %v1090
  %v1097 = vmul.f32 %v1091, %v1091
  %v1098 = vmul.f32 %v1092, %v1092
  %v1099 = vadd.f32 %v1093, 0.0
  %v1100 = vadd.f32 %v1094, 0.0
  %v1101 = vadd.f32 %v1095, 0.0
  %v1102 = vadd.f32 %v1096, 0.0
  %v1103 = vadd.f32 %v1097, 0.0
  %v1104 = vadd.f32 %v1098, 0.0
  %s1105 = scalar_lea.vmem %s2, 96
  %v1106 = vld [vmem:[%s1105] sm:$0xff]
  %v1107 = vld [vmem:[%s1105 + $0x8] sm:$0xff]
  %v1108 = vld [vmem:[%s1105 + $0x10] sm:$0xff]
  %v1109 = vld [vmem:[%s1105 + $0x18] sm:$0xff]
  %v1110 = vld [vmem:[%s1105 + $0x20] sm:$0xff]
  %v1111 = vld [vmem:[%s1105 + $0x28] sm:$0xff]
  %v1112 = vld [vmem:[%s1105 + $0x30] sm:$0x7]
  %v1113 = vld [vmem:[%s1105 + $0x38] sm:$0x7]
  %v1114 = vld [vmem:[%s1105 + $0x40] sm:$0x7]
  %v1115 = vld [vmem:[%s1105 + $0x48] sm:$0x7]
  %v1116 = vld [vmem:[%s1105 + $0x50] sm:$0x7]
  %v1117 = vld [vmem:[%s1105 + $0x58] sm:$0x7]
  %s1118 = scalar_lea.vmem %s2, 288
  %v1119 = vld [vmem:[%s1118] sm:$0xff]
  %v1120 = vld [vmem:[%s1118 + $0x8] sm:$0xff]
  %v1121 = vld [vmem:[%s1118 + $0x10] sm:$0xff]
  %v1122 = vld [vmem:[%s1118 + $0x18] sm:$0xff]
  %v1123 = vld [vmem:[%s1118 + $0x20] sm:$0xff]
  %v1124 = vld [vmem:[%s1118 + $0x28] sm:$0xff]
  %v1125 = vld [vmem:[%s1118 + $0x30] sm:$0x7]
  %v1126 = vld [vmem:[%s1118 + $0x38] sm:$0x7]
  %v1127 = vld [vmem:[%s1118 + $0x40] sm:$0x7]
  %v1128 = vld [vmem:[%s1118 + $0x48] sm:$0x7]
  %v1129 = vld [vmem:[%s1118 + $0x50] sm:$0x7]
  %v1130 = vld [vmem:[%s1118 + $0x58] sm:$0x7]
  %v1131 = vlaneseq
  %v1132 = vshrl.u32 %v1131, 7
  %v1133 = vsub.s32 6, %v1132
  %v1134 = vrot.slane %v1106, %v1133
  %v1135 = vlaneseq
  %v1136 = vshrl.u32 %v1135, 7
  %v1137 = vsub.s32 6, %v1136
  %v1138 = vrot.slane %v1107, %v1137
  %v1139 = vlaneseq
  %v1140 = vshrl.u32 %v1139, 7
  %v1141 = vsub.s32 6, %v1140
  %v1142 = vrot.slane %v1108, %v1141
  %v1143 = vlaneseq
  %v1144 = vshrl.u32 %v1143, 7
  %v1145 = vsub.s32 6, %v1144
  %v1146 = vrot.slane %v1109, %v1145
  %v1147 = vlaneseq
  %v1148 = vshrl.u32 %v1147, 7
  %v1149 = vsub.s32 6, %v1148
  %v1150 = vrot.slane %v1110, %v1149
  %v1151 = vlaneseq
  %v1152 = vshrl.u32 %v1151, 7
  %v1153 = vsub.s32 6, %v1152
  %v1154 = vrot.slane %v1111, %v1153
  %v1155 = vsub.f32 %v1134, %v1106
  %v1156 = vsub.f32 %v1138, %v1107
  %v1157 = vsub.f32 %v1142, %v1108
  %v1158 = vsub.f32 %v1146, %v1109
  %v1159 = vsub.f32 %v1150, %v1110
  %v1160 = vsub.f32 %v1154, %v1111
  %v1161 = vsub.f32 %v1134, %v1112
  %v1162 = vsub.f32 %v1138, %v1113
  %v1163 = vsub.f32 %v1142, %v1114
  %v1164 = vsub.f32 %v1146, %v1115
  %v1165 = vsub.f32 %v1150, %v1116
  %v1166 = vsub.f32 %v1154, %v1117
  %v1167 = vmul.f32 %v1155, %v1155
  %v1168 = vmul.f32 %v1156, %v1156
  %v1169 = vmul.f32 %v1157, %v1157
  %v1170 = vmul.f32 %v1158, %v1158
  %v1171 = vmul.f32 %v1159, %v1159
  %v1172 = vmul.f32 %v1160, %v1160
  %v1173 = vmul.f32 %v1161, %v1161
  %v1174 = vmul.f32 %v1162, %v1162
  %v1175 = vmul.f32 %v1163, %v1163
  %v1176 = vmul.f32 %v1164, %v1164
  %v1177 = vmul.f32 %v1165, %v1165
  %v1178 = vmul.f32 %v1166, %v1166
  %v1179 = vadd.f32 %v1015, %v1167
  %v1180 = vadd.f32 %v1016, %v1168
  %v1181 = vadd.f32 %v1017, %v1169
  %v1182 = vadd.f32 %v1018, %v1170
  %v1183 = vadd.f32 %v1019, %v1171
  %v1184 = vadd.f32 %v1020, %v1172
  %v1185 = vadd.f32 %v1021, %v1173
  %v1186 = vadd.f32 %v1022, %v1174
  %v1187 = vadd.f32 %v1023, %v1175
  %v1188 = vadd.f32 %v1024, %v1176
  %v1189 = vadd.f32 %v1025, %v1177
  %v1190 = vadd.f32 %v1026, %v1178
  %v1191 = vlaneseq
  %v1192 = vshrl.u32 %v1191, 7
  %v1193 = vsub.s32 6, %v1192
  %v1194 = vrot.slane %v1119, %v1193
  %v1195 = vlaneseq
  %v1196 = vshrl.u32 %v1195, 7
  %v1197 = vsub.s32 6, %v1196
  %v1198 = vrot.slane %v1120, %v1197
  %v1199 = vlaneseq
  %v1200 = vshrl.u32 %v1199, 7
  %v1201 = vsub.s32 6, %v1200
  %v1202 = vrot.slane %v1121, %v1201
  %v1203 = vlaneseq
  %v1204 = vshrl.u32 %v1203, 7
  %v1205 = vsub.s32 6, %v1204
  %v1206 = vrot.slane %v1122, %v1205
  %v1207 = vlaneseq
  %v1208 = vshrl.u32 %v1207, 7
  %v1209 = vsub.s32 6, %v1208
  %v1210 = vrot.slane %v1123, %v1209
  %v1211 = vlaneseq
  %v1212 = vshrl.u32 %v1211, 7
  %v1213 = vsub.s32 6, %v1212
  %v1214 = vrot.slane %v1124, %v1213
  %v1215 = vsub.f32 %v1194, %v1119
  %v1216 = vsub.f32 %v1198, %v1120
  %v1217 = vsub.f32 %v1202, %v1121
  %v1218 = vsub.f32 %v1206, %v1122
  %v1219 = vsub.f32 %v1210, %v1123
  %v1220 = vsub.f32 %v1214, %v1124
  %v1221 = vsub.f32 %v1194, %v1125
  %v1222 = vsub.f32 %v1198, %v1126
  %v1223 = vsub.f32 %v1202, %v1127
  %v1224 = vsub.f32 %v1206, %v1128
  %v1225 = vsub.f32 %v1210, %v1129
  %v1226 = vsub.f32 %v1214, %v1130
  %v1227 = vand.u32 2147483647, %v1215
  %v1228 = vand.u32 2147483647, %v1216
  %v1229 = vand.u32 2147483647, %v1217
  %v1230 = vand.u32 2147483647, %v1218
  %v1231 = vand.u32 2147483647, %v1219
  %v1232 = vand.u32 2147483647, %v1220
  %v1233 = vand.u32 2147483647, %v1221
  %v1234 = vand.u32 2147483647, %v1222
  %v1235 = vand.u32 2147483647, %v1223
  %v1236 = vand.u32 2147483647, %v1224
  %v1237 = vand.u32 2147483647, %v1225
  %v1238 = vand.u32 2147483647, %v1226
  %v1239 = vadd.f32 %v1075, %v1227
  %v1240 = vadd.f32 %v1076, %v1228
  %v1241 = vadd.f32 %v1077, %v1229
  %v1242 = vadd.f32 %v1078, %v1230
  %v1243 = vadd.f32 %v1079, %v1231
  %v1244 = vadd.f32 %v1080, %v1232
  %v1245 = vadd.f32 %v1081, %v1233
  %v1246 = vadd.f32 %v1082, %v1234
  %v1247 = vadd.f32 %v1083, %v1235
  %v1248 = vadd.f32 %v1084, %v1236
  %v1249 = vadd.f32 %v1085, %v1237
  %v1250 = vadd.f32 %v1086, %v1238
  %v1251 = vsub.f32 %v1106, %v1119
  %v1252 = vsub.f32 %v1107, %v1120
  %v1253 = vsub.f32 %v1108, %v1121
  %v1254 = vsub.f32 %v1109, %v1122
  %v1255 = vsub.f32 %v1110, %v1123
  %v1256 = vsub.f32 %v1111, %v1124
  %v1257 = vmul.f32 %v1251, %v1251
  %v1258 = vmul.f32 %v1252, %v1252
  %v1259 = vmul.f32 %v1253, %v1253
  %v1260 = vmul.f32 %v1254, %v1254
  %v1261 = vmul.f32 %v1255, %v1255
  %v1262 = vmul.f32 %v1256, %v1256
  %v1263 = vadd.f32 %v1099, %v1257
  %v1264 = vadd.f32 %v1100, %v1258
  %v1265 = vadd.f32 %v1101, %v1259
  %v1266 = vadd.f32 %v1102, %v1260
  %v1267 = vadd.f32 %v1103, %v1261
  %v1268 = vadd.f32 %v1104, %v1262
  %v1269 = vsub.f32 0.0, %v1179
  %v1270 = vsub.f32 0.0, %v1180
  %v1271 = vsub.f32 0.0, %v1181
  %v1272 = vsub.f32 0.0, %v1182
  %v1273 = vsub.f32 0.0, %v1183
  %v1274 = vsub.f32 0.0, %v1184
  %v1275 = vsub.f32 0.0, %v1185
  %v1276 = vsub.f32 0.0, %v1186
  %v1277 = vsub.f32 0.0, %v1187
  %v1278 = vsub.f32 0.0, %v1188
  %v1279 = vsub.f32 0.0, %v1189
  %v1280 = vsub.f32 0.0, %v1190
  %v1281 = vmul.f32 %v1269, 0.5
  %v1282 = vmul.f32 %v1270, 0.5
  %v1283 = vmul.f32 %v1271, 0.5
  %v1284 = vmul.f32 %v1272, 0.5
  %v1285 = vmul.f32 %v1273, 0.5
  %v1286 = vmul.f32 %v1274, 0.5
  %v1287 = vmul.f32 %v1275, 0.5
  %v1288 = vmul.f32 %v1276, 0.5
  %v1289 = vmul.f32 %v1277, 0.5
  %v1290 = vmul.f32 %v1278, 0.5
  %v1291 = vmul.f32 %v1279, 0.5
  %v1292 = vmul.f32 %v1280, 0.5
  %v1293 = vmul.f32 %v1281, 1.442695
  %v1294 = vpow.pop %v1293
  %v1295 = vmul.f32 %v1282, 1.442695
  %v1296 = vpow.pop %v1295
  %v1297 = vmul.f32 %v1283, 1.442695
  %v1298 = vpow.pop %v1297
  %v1299 = vmul.f32 %v1284, 1.442695
  %v1300 = vpow.pop %v1299
  %v1301 = vmul.f32 %v1285, 1.442695
  %v1302 = vpow.pop %v1301
  %v1303 = vmul.f32 %v1286, 1.442695
  %v1304 = vpow.pop %v1303
  %v1305 = vmul.f32 %v1287, 1.442695
  %v1306 = vpow.pop %v1305
  %v1307 = vmul.f32 %v1288, 1.442695
  %v1308 = vpow.pop %v1307
  %v1309 = vmul.f32 %v1289, 1.442695
  %v1310 = vpow.pop %v1309
  %v1311 = vmul.f32 %v1290, 1.442695
  %v1312 = vpow.pop %v1311
  %v1313 = vmul.f32 %v1291, 1.442695
  %v1314 = vpow.pop %v1313
  %v1315 = vmul.f32 %v1292, 1.442695
  %v1316 = vpow.pop %v1315
  %v1317 = vmul.f32 %v1294, %v1239
  %v1318 = vmul.f32 %v1296, %v1240
  %v1319 = vmul.f32 %v1298, %v1241
  %v1320 = vmul.f32 %v1300, %v1242
  %v1321 = vmul.f32 %v1302, %v1243
  %v1322 = vmul.f32 %v1304, %v1244
  %v1323 = vmul.f32 %v1306, %v1245
  %v1324 = vmul.f32 %v1308, %v1246
  %v1325 = vmul.f32 %v1310, %v1247
  %v1326 = vmul.f32 %v1312, %v1248
  %v1327 = vmul.f32 %v1314, %v1249
  %v1328 = vmul.f32 %v1316, %v1250
  %v1329 = vadd.f32 %v1317, %v1318
  %v1330 = vadd.f32 %v1329, %v1319
  %v1331 = vadd.f32 %v1330, %v1320
  %v1332 = vadd.f32 %v1331, %v1321
  %v1333 = vadd.f32 %v1332, %v1322
  %vm1334 = vcmask 1042432
  %v1335 = vsel %vm1334, %v1323, 0.0
  %v1336 = vadd.f32 %v1333, %v1335
  %v1337 = vsel %vm1334, %v1324, 0.0
  %v1338 = vadd.f32 %v1336, %v1337
  %v1339 = vsel %vm1334, %v1325, 0.0
  %v1340 = vadd.f32 %v1338, %v1339
  %v1341 = vsel %vm1334, %v1326, 0.0
  %v1342 = vadd.f32 %v1340, %v1341
  %v1343 = vsel %vm1334, %v1327, 0.0
  %v1344 = vadd.f32 %v1342, %v1343
  %v1345 = vsel %vm1334, %v1328, 0.0
  %v1346 = vadd.f32 %v1344, %v1345
  %1347 = vadd.xlane.f32.xlu0 %v1346
  %v1348 = vpop.xlane.xlu0 %1347
  %v1349 = vrot.slane %v1348, 4
  %v1350 = vadd.f32 %v1348, %v1349
  %v1351 = vrot.slane %v1350, 2
  %v1352 = vadd.f32 %v1350, %v1351
  %v1353 = vrot.slane %v1352, 1
  %v1354 = vadd.f32 %v1352, %v1353
  %s1355 = vtos %v1354
  %v1356 = vstv %s1355
  %v1357 = vmul.f32 %v1356, 0.5
  %v1364 = vrot.slane %v1263, 6
  %v1365 = vrot.slane %v1264, 6
  %v1366 = vrot.slane %v1265, 6
  %v1367 = vrot.slane %v1266, 6
  %v1368 = vrot.slane %v1267, 6
  %v1369 = vrot.slane %v1268, 6
  %vm1376 = vcmask 1040384
  %v1377 = vsel %vm1376, %v1364, 0.0
  %v1378 = vsel %vm1376, %v1365, 0.0
  %v1379 = vadd.f32 %v1377, %v1378
  %v1380 = vsel %vm1376, %v1366, 0.0
  %v1381 = vadd.f32 %v1379, %v1380
  %v1382 = vsel %vm1376, %v1367, 0.0
  %v1383 = vadd.f32 %v1381, %v1382
  %v1384 = vsel %vm1376, %v1368, 0.0
  %v1385 = vadd.f32 %v1383, %v1384
  %v1386 = vsel %vm1376, %v1369, 0.0
  %v1387 = vadd.f32 %v1385, %v1386
  %1388 = vadd.xlane.f32.xlu0 %v1387
  %v1389 = vpop.xlane.xlu0 %1388
  %v1390 = vrot.slane %v1389, 4
  %v1391 = vadd.f32 %v1389, %v1390
  %v1392 = vrot.slane %v1391, 2
  %v1393 = vadd.f32 %v1391, %v1392
  %v1394 = vrot.slane %v1393, 1
  %v1395 = vadd.f32 %v1393, %v1394
  %s1396 = vtos %v1395
  %v1397 = vstv %s1396
  %v1398 = vmul.f32 %v1397, 0.05
  %v1399 = vadd.f32 %v1357, %v1398
  %v1400 = vmul.f32 %v902, 0.01
  %v1401 = vadd.f32 %v58, %v1400
  %v1402 = vadd.f32 %v1401, %v1399
  %v1403 = vmul.f32 %v941, 0.5
  %v1404 = vadd.f32 %v1402, %v1403
  %v1405 = vlaneseq
  %v1406 = vand.u32 %v1405, 127
  %vm1407 = vcmp.eq.s32.totalorder %v1406, 0
  %v1408 = vsel %vm1407, %v58, 0.0
  %vm1409 = vcmp.eq.s32.totalorder %v1406, 1
  %1411 = vset.pattern.permute.xlu0 0
  %1412 = vperm.xlu0 %1411, %v902
  %v1413 = vpop.permute.xlu0 %1412
  %v1415 = vsel %vm1409, %v1413, 0.0
  %v1416 = vadd.f32 %v1408, %v1415
  %vm1417 = vcmp.eq.s32.totalorder %v1406, 2
  %v1418 = vsel %vm1417, %v1399, 0.0
  %v1419 = vadd.f32 %v1416, %v1418
  %vm1420 = vcmp.eq.s32.totalorder %v1406, 3
  %v1421 = vsel %vm1420, %v941, 0.0
  %v1422 = vadd.f32 %v1419, %v1421
  %vm1423 = vcmp.eq.s32.totalorder %v1406, 4
  %1425 = vset.pattern.permute.xlu0 0
  %1426 = vperm.xlu0 %1425, %v1404
  %v1427 = vpop.permute.xlu0 %1426
  %v1429 = vsel %vm1423, %v1427, 0.0
  %v1430 = vadd.f32 %v1422, %v1429
  %1431 = vst [vmem:[%s3 - $0x4] sm:$0x10] %v1430
  // Predicated region
  $region14: #{total_loss_15.1} parent=0 // pred_check
    _
  $region15: #{total_loss_15.1} parent=0 // pred_check_branch
    %1433 = sbr.rel (0) target = $region17
  $region16: #{total_loss_15.1} parent=0 // pred_region
    _
  $region17: #{total_loss_15.1} parent=0 // pred_fallthru
    _
  // Predicated region
  $region18: #{total_loss_15.1} parent=0 // pred_check
    _
  $region19: #{total_loss_15.1} parent=0 // pred_check_branch
    %1435 = sbr.rel (0) target = $region21
  $region20: #{total_loss_15.1} parent=0 // pred_region
    _
  $region21: #{total_loss_15.1} parent=0 // pred_fallthru
    _

</llo_original>
